<compile_context>
chip_gen: v5e
topology: v5e:2x2
jax: 0.10.0
libtpu: 0.0.40
codegen_flags: <defaults>
</compile_context>

<pallas_src>
import math
from functools import partial

import jax
import jax.numpy as jnp
from jax import lax
from jax.experimental import pallas as pl
from jax.experimental.pallas import tpu as pltpu

EPS = 1e-5  # torch.nn.GroupNorm default


def _round_up(x, m):
    return ((x + m - 1) // m) * m


def _tpu_vmem_capacity():
    try:
        return int(pltpu.get_tpu_info().vmem_capacity_bytes)
    except Exception:
        return 64 << 20  # conservative default (v7x per-core VMEM)


# -----------------------------------------------------------------------------
# Pass 1: bias-free modulated-deformable 3x3 conv as a lane-dense matmul
#         y_nb[Cout, hw_tile] = W[Cout, K*Cin] @ cols[K*Cin, hw_tile]
#         plus per-channel sum / sum-of-squares accumulated over the HW axis
#         (per (image, chunk) pair — chunk axis feeds v7x's 2nd TensorCore).
# -----------------------------------------------------------------------------
def conv_stats_kernel(cols_ref, w_ref, y_ref, sum_ref, sq_ref):
    j = pl.program_id(2)

    @pl.when(j == 0)
    def _():
        sum_ref[...] = jnp.zeros_like(sum_ref)
        sq_ref[...] = jnp.zeros_like(sq_ref)

    # bf16 operands, f32 accumulation on the MXU.  No bias here: it is folded
    # analytically into the GroupNorm stats / shift in the wrapper, which also
    # guarantees that zero-padded lanes contribute exactly 0 to sum / sumsq.
    y = jnp.dot(w_ref[...], cols_ref[0], preferred_element_type=jnp.float32)
    y_ref[0] = y

    # NOTE: group variance is later formed as E[y^2] - E[y]^2 in f32; fine for
    # conv-scale activations (documented cancellation concern for huge magnitudes).
    sum_ref[0, 0] += jnp.sum(y, axis=1, keepdims=True)      # [Cout, 1]
    sq_ref[0, 0] += jnp.sum(y * y, axis=1, keepdims=True)   # [Cout, 1]


def conv_stats_pallas(cols, w_kc, hw_tile, n_chunks, n_hw_pc, vmem_limit):
    n, kc, hw_p = cols.shape
    cout = w_kc.shape[0]

    return pl.pallas_call(
        conv_stats_kernel,
        out_shape=(
            jax.ShapeDtypeStruct((n, cout, hw_p), jnp.float32),        # y (no bias)
            jax.ShapeDtypeStruct((n, n_chunks, cout, 1), jnp.float32), # per-chan sum
            jax.ShapeDtypeStruct((n, n_chunks, cout, 1), jnp.float32), # per-chan sumsq
        ),
        grid_spec=pltpu.PrefetchScalarGridSpec(
            num_scalar_prefetch=0,
            grid=(n, n_chunks, n_hw_pc),
            in_specs=[
                pl.BlockSpec((1, kc, hw_tile),
                             lambda i, c, j: (i, 0, c * n_hw_pc + j)),
                pl.BlockSpec((cout, kc), lambda i, c, j: (0, 0)),
            ],
            out_specs=[
                pl.BlockSpec((1, cout, hw_tile),
                             lambda i, c, j: (i, 0, c * n_hw_pc + j)),
                pl.BlockSpec((1, 1, cout, 1), lambda i, c, j: (i, c, 0, 0)),  # resident acc
                pl.BlockSpec((1, 1, cout, 1), lambda i, c, j: (i, c, 0, 0)),  # resident acc
            ],
        ),
        compiler_params=pltpu.CompilerParams(
            dimension_semantics=("parallel", "parallel", "arbitrary"),
            vmem_limit_bytes=vmem_limit),
    )(cols, w_kc)


# -----------------------------------------------------------------------------
# Pass 2: GroupNorm apply — per-channel affine  out = y_nb * scale + shift,
#         written in place over the y buffer (input_output_aliases).
# -----------------------------------------------------------------------------
def norm_kernel(y_ref, scale_ref, shift_ref, o_ref):
    o_ref[0] = y_ref[0] * scale_ref[0] + shift_ref[0]


def norm_pallas(y, scale_c, shift_c, hw_tile, vmem_limit):
    n, cout, hw_p = y.shape
    n_hw = hw_p // hw_tile
    return pl.pallas_call(
        norm_kernel,
        out_shape=jax.ShapeDtypeStruct((n, cout, hw_p), jnp.float32),
        grid_spec=pltpu.PrefetchScalarGridSpec(
            num_scalar_prefetch=0,
            grid=(n, n_hw),
            in_specs=[
                pl.BlockSpec((1, cout, hw_tile), lambda i, j: (i, 0, j)),
                pl.BlockSpec((1, cout, 1), lambda i, j: (i, 0, 0)),
                pl.BlockSpec((1, cout, 1), lambda i, j: (i, 0, 0)),
            ],
            out_specs=pl.BlockSpec((1, cout, hw_tile), lambda i, j: (i, 0, j)),
        ),
        input_output_aliases={0: 0},   # normalize y in place (no extra HBM slab)
        compiler_params=pltpu.CompilerParams(
            dimension_semantics=("parallel", "parallel"),
            vmem_limit_bytes=vmem_limit),
    )(y, scale_c.reshape(n, cout, 1), shift_c.reshape(n, cout, 1))


# -----------------------------------------------------------------------------
# Tiling helpers (generation-aware).
# -----------------------------------------------------------------------------
def _pick_hw_tile(hw, kc, cout, budget_bytes):
    """Largest HW tile (multiple of 128) whose double-buffered pass-1 footprint
    (bf16 cols tile + f32 y tile) fits the budget.  HW is always padded up to a
    multiple of the chosen tile, so no monolithic-tile fallback exists."""
    per_lane = 2 * (kc * 2 + cout * 4)                       # 2x: double buffering
    max_t = max(128, (budget_bytes // per_lane) // 128 * 128)
    return min(max_t, _round_up(hw, 128))


def _vmem_limit(tile_bytes, vmem_cap):
    # 2x for double buffering + headroom, capped below the physical VMEM of the
    # current generation (48 MiB on 64 MiB parts, 96 MiB on 128 MiB parts).
    cap = (48 << 20) if vmem_cap <= (64 << 20) else (96 << 20)
    floor = 16 << 20
    return int(min(max(2 * tile_bytes + (4 << 20), floor), cap))


# -----------------------------------------------------------------------------
# Plain-JAX glue: deformable bilinear sampling -> im2col columns (bf16).
# -----------------------------------------------------------------------------
def deform_im2col(x, offset, mask, stride=1, pad=1, dil=1, ksize=3):
    n, cin, h, w = x.shape
    kk = ksize * ksize
    ho = (h + 2 * pad - dil * (ksize - 1) - 1) // stride + 1
    wo = (w + 2 * pad - dil * (ksize - 1) - 1) // stride + 1

    k_idx = jnp.arange(kk)
    ki = (k_idx // ksize).astype(jnp.float32)          # kernel row
    kj = (k_idx % ksize).astype(jnp.float32)           # kernel col

    base_y = (jnp.arange(ho, dtype=jnp.float32) * stride - pad)[None, None, :, None] \
             + (ki * dil)[None, :, None, None]
    base_x = (jnp.arange(wo, dtype=jnp.float32) * stride - pad)[None, None, None, :] \
             + (kj * dil)[None, :, None, None]

    off = offset.reshape(n, kk, 2, ho, wo)             # mmcv layout: (y, x) per k
    sy = base_y + off[:, :, 0]                         # [N, K, Ho, Wo]
    sx = base_x + off[:, :, 1]

    y0 = jnp.floor(sy)
    x0 = jnp.floor(sx)
    ly = sy - y0
    lx = sx - x0
    hy = 1.0 - ly
    hx = 1.0 - lx
    y0i = y0.astype(jnp.int32)
    x0i = x0.astype(jnp.int32)
    y1i = y0i + 1
    x1i = x0i + 1

    def gather(img, yi, xi):
        valid = (yi >= 0) & (yi < h) & (xi >= 0) & (xi < w)
        yc = jnp.clip(yi, 0, h - 1)
        xc = jnp.clip(xi, 0, w - 1)
        v = img[:, yc, xc]                             # [Cin, K, Ho, Wo]
        return v * valid[None].astype(img.dtype)

    def sample_one(img, y0i, x0i, y1i, x1i, hy, hx, ly, lx):
        v00 = gather(img, y0i, x0i)
        v01 = gather(img, y0i, x1i)
        v10 = gather(img, y1i, x0i)
        v11 = gather(img, y1i, x1i)
        return (v00 * (hy * hx)[None] + v01 * (hy * lx)[None]
                + v10 * (ly * hx)[None] + v11 * (ly * lx)[None])

    vals = jax.vmap(sample_one)(x, y0i, x0i, y1i, x1i, hy, hx, ly, lx)  # [N,Cin,K,Ho,Wo]
    vals = vals * mask[:, None]                                          # modulation
    # [N, Cin, K, Ho, Wo] -> [N, Cin*K, Ho*Wo]: cin-major / k-minor = weight flatten
    # order; K*Cin on the sublane axis, HW on the lane axis. Built in bf16 so the
    # 9x-input HBM slab is halved.
    cols = vals.reshape(n, cin * kk, ho * wo).astype(jnp.bfloat16)
    return cols, ho, wo


@partial(jax.jit, static_argnames=("stride", "num_groups", "hw_tile"))
def conv3x3norm_forward(x, offset, mask, weight, bias, gamma, beta,
                        stride=1, num_groups=16, hw_tile=None):
    n, cin, _, _ = x.shape
    cout = weight.shape[0]
    cpg = cout // num_groups

    cols, ho, wo = deform_im2col(x, offset, mask, stride=stride, pad=1, dil=1, ksize=3)
    hw = ho * wo
    kc = cin * 9
    w_kc = weight.reshape(cout, kc).astype(jnp.bfloat16)                # [Cout, K*Cin]

    vmem_cap = _tpu_vmem_capacity()
    budget = (8 << 20) if vmem_cap <= (64 << 20) else (28 << 20)
    if hw_tile is None:
        hw_tile = _pick_hw_tile(hw, kc, cout, budget)
    assert hw_tile % 128 == 0

    # Zero-pad the lane (HW) axis so it divides into hw_tile-sized tiles; the
    # extra chunk axis keeps both v7x TensorCores fed when N is small / odd.
    n_tiles = -(-hw // hw_tile)
    n_chunks = 2 if n_tiles >= 2 else 1
    n_tiles = _round_up(n_tiles, n_chunks)
    hw_padded = n_tiles * hw_tile
    n_hw_pc = n_tiles // n_chunks
    cols_p = cols if hw_padded == hw else jnp.pad(
        cols, ((0, 0), (0, 0), (0, hw_padded - hw)))

    vmem1 = _vmem_limit(kc * hw_tile * 2 + cout * hw_tile * 4 + cout * kc * 2, vmem_cap)
    vmem2 = _vmem_limit(2 * cout * hw_tile * 4, vmem_cap)

    # Pass 1: bias-free conv + per-channel sum/sumsq accumulated across HW tiles.
    y, sum_o, sq_o = conv_stats_pallas(cols_p, w_kc, hw_tile, n_chunks, n_hw_pc, vmem1)

    # Tiny [N, Cout]-sized GroupNorm stat pooling in JAX.  The conv bias is folded
    # analytically:  sum(y) = sum(y_nb) + b*HW,
    #                sum(y^2) = sum(y_nb^2) + 2*b*sum(y_nb) + HW*b^2.
    sum_c = jnp.sum(sum_o, axis=1)[..., 0]                              # [N, Cout]
    sq_c = jnp.sum(sq_o, axis=1)[..., 0]
    hw_f = float(hw)                                                    # TRUE HW, not padded
    sum_b = sum_c + bias[None, :] * hw_f
    sq_b = sq_c + 2.0 * bias[None, :] * sum_c + hw_f * bias[None, :] ** 2

    cnt = hw_f * cpg
    gsum = sum_b.reshape(n, num_groups, cpg).sum(-1)                    # [N, G]
    gsq = sq_b.reshape(n, num_groups, cpg).sum(-1)
    mean_g = gsum / cnt
    var_g = gsq / cnt - mean_g * mean_g                                 # biased var (torch)
    inv_g = lax.rsqrt(var_g + EPS)
    mean_c = jnp.repeat(mean_g, cpg, axis=1)                            # [N, Cout]
    inv_c = jnp.repeat(inv_g, cpg, axis=1)
    scale_c = inv_c * gamma[None, :]
    shift_c = beta[None, :] + (bias[None, :] - mean_c) * scale_c        # bias folded here

    # Pass 2: normalize + affine in place; output is already NCHW-flat.
    out_flat = norm_pallas(y, scale_c, shift_c, hw_tile, vmem2)
    out = out_flat[:, :, :hw].reshape(n, cout, ho, wo)
    return out, cols, w_kc


if __name__ == "__main__":
    N, Cin, Cout = 2, 16, 16
    stride = 1
    num_groups = 16

    key = jax.random.PRNGKey(0)

    def reference(cols_bf, w_bf, bias, gamma, beta, ho, wo):
        # Same bf16-rounded operands, f32 accumulation (matches MXU bf16 path).
        y = jnp.einsum("nks,ck->ncs", cols_bf.astype(jnp.float32),
                       w_bf.astype(jnp.float32)) + bias[None, :, None]
        cpg = Cout // num_groups
        yg = y.reshape(N, num_groups, cpg, ho * wo)
        mu = yg.mean(axis=(2, 3), keepdims=True)
        var = ((yg - mu) ** 2).mean(axis=(2, 3), keepdims=True)
        ref = ((yg - mu) / jnp.sqrt(var + EPS)).reshape(N, Cout, ho * wo)
        ref = ref * gamma[None, :, None] + beta[None, :, None]
        return ref.reshape(N, Cout, ho, wo)

    n_fan = Cin * 3 * 3
    stdv = 1.0 / math.sqrt(n_fan)

    # Case A: H=W=16 (HW=256, already a multiple of 128), zero bias (module default).
    # Case B: H=W=15 (HW=225, NOT a multiple of 128 -> exercises lane padding),
    #         nonzero bias to exercise the analytic bias folding.
    for case_i, (H, W, use_bias) in enumerate([(16, 16, False), (15, 15, True)]):
        kx, ko, km, kw, kb, key = jax.random.split(key, 6)
        x = jax.random.normal(kx, (N, Cin, H, W), dtype=jnp.float32)
        Ho = (H + 2 - 2 - 1) // stride + 1
        Wo = (W + 2 - 2 - 1) // stride + 1
        offset = 0.5 * jax.random.normal(ko, (N, 18, Ho, Wo), dtype=jnp.float32)
        mask = jax.nn.sigmoid(jax.random.normal(km, (N, 9, Ho, Wo), dtype=jnp.float32))

        weight = jax.random.uniform(kw, (Cout, Cin, 3, 3), jnp.float32, -stdv, stdv)
        bias = (0.1 * jax.random.normal(kb, (Cout,), dtype=jnp.float32)
                if use_bias else jnp.zeros((Cout,), jnp.float32))
        gamma = jnp.ones((Cout,), jnp.float32)
        beta = jnp.zeros((Cout,), jnp.float32)

        # Forced small HW tile: multi-tile + chunked-stats (2-core) accumulator path.
        out_tiled, cols, w_kc = conv3x3norm_forward(
            x, offset, mask, weight, bias, gamma, beta,
            stride=stride, num_groups=num_groups, hw_tile=128)
        out_tiled = jax.block_until_ready(out_tiled)

        # Auto tile size (single HW tile at these small shapes).
        out_auto, _, _ = conv3x3norm_forward(
            x, offset, mask, weight, bias, gamma, beta,
            stride=stride, num_groups=num_groups, hw_tile=None)
        out_auto = jax.block_until_ready(out_auto)

        ref = reference(cols, w_kc, bias, gamma, beta, Ho, Wo)
        assert jnp.allclose(out_tiled, ref, atol=2e-4, rtol=2e-4), f"case {case_i} tiled"
        assert jnp.allclose(out_auto, ref, atol=2e-4, rtol=2e-4), f"case {case_i} auto"

    print("KERNEL_OK")
</pallas_src>

<mosaic_0001>
module attributes {stable_mosaic.version = 11 : i64} {
  func.func @conv_stats_kernel(%arg0: i32, %arg1: i32, %arg2: i32, %arg3: memref<1x144x128xbf16, #tpu.memory_space<vmem>>, %arg4: memref<16x144xbf16, #tpu.memory_space<vmem>>, %arg5: memref<1x16x128xf32, #tpu.memory_space<vmem>>, %arg6: memref<1x1x16x1xf32, #tpu.memory_space<vmem>>, %arg7: memref<1x1x16x1xf32, #tpu.memory_space<vmem>>) attributes {dimension_semantics = [#tpu.dimension_semantics<parallel>, #tpu.dimension_semantics<parallel>, #tpu.dimension_semantics<arbitrary>], iteration_bounds = array<i64: 2, 2, 1>, scalar_prefetch = 0 : i64, scratch_operands = 0 : i64, tpu.core_type = #tpu.core_type<tc>, window_params = [{transform_indices = @transform_0, window_bounds = array<i64: 1, 144, 128>}, {pipeline_mode = #tpu.pipeline_mode<synchronous>, transform_indices = @transform_1, window_bounds = array<i64: 16, 144>}, {transform_indices = @transform_2, window_bounds = array<i64: 1, 16, 128>}, {transform_indices = @transform_3, window_bounds = array<i64: 1, 1, 16, 1>}, {transform_indices = @transform_4, window_bounds = array<i64: 1, 1, 16, 1>}]} {
    %c0_i32 = arith.constant 0 : i32
    %0 = arith.cmpi eq, %arg2, %c0_i32 : i32
    %1 = arith.extui %0 : i1 to i32
    %c0_i32_0 = arith.constant 0 : i32
    %2 = arith.cmpi ne, %1, %c0_i32_0 : i32
    scf.if %2 {
      %cst_26 = arith.constant 0.000000e+00 : f32
      %27 = vector.broadcast %cst_26 : f32 to vector<1x1x16x1xf32>
      %c0_27 = arith.constant 0 : index
      %c0_28 = arith.constant 0 : index
      %c0_29 = arith.constant 0 : index
      %c0_30 = arith.constant 0 : index
      %28 = vector.load %arg6[%c0_27, %c0_28, %c0_29, %c0_30] : memref<1x1x16x1xf32, #tpu.memory_space<vmem>>, vector<1x1x16x1xf32>
      tpu.vector_store %arg6[%c0_27, %c0_28, %c0_29, %c0_30], %27 {strides = array<i32>} : memref<1x1x16x1xf32, #tpu.memory_space<vmem>>, vector<1x1x16x1xf32>,
      %cst_31 = arith.constant 0.000000e+00 : f32
      %29 = vector.broadcast %cst_31 : f32 to vector<1x1x16x1xf32>
      %c0_32 = arith.constant 0 : index
      %c0_33 = arith.constant 0 : index
      %c0_34 = arith.constant 0 : index
      %c0_35 = arith.constant 0 : index
      %30 = vector.load %arg7[%c0_32, %c0_33, %c0_34, %c0_35] : memref<1x1x16x1xf32, #tpu.memory_space<vmem>>, vector<1x1x16x1xf32>
      tpu.vector_store %arg7[%c0_32, %c0_33, %c0_34, %c0_35], %29 {strides = array<i32>} : memref<1x1x16x1xf32, #tpu.memory_space<vmem>>, vector<1x1x16x1xf32>,
    } else {
    }
    %c0 = arith.constant 0 : index
    %c0_1 = arith.constant 0 : index
    %3 = vector.load %arg4[%c0, %c0_1] : memref<16x144xbf16, #tpu.memory_space<vmem>>, vector<16x144xbf16>
    %c0_2 = arith.constant 0 : index
    %c0_3 = arith.constant 0 : index
    %c0_4 = arith.constant 0 : index
    %4 = vector.load %arg3[%c0_2, %c0_3, %c0_4] : memref<1x144x128xbf16, #tpu.memory_space<vmem>>, vector<1x144x128xbf16>
    %5 = vector.shape_cast %4 : vector<1x144x128xbf16> to vector<144x128xbf16>
    %cst = arith.constant dense<0.000000e+00> : vector<16x128xf32>
    %6 = tpu.matmul %3, %5, %cst {dimension_numbers = #tpu.dot_dimension_numbers<[1], [0], [0], [1], [0, 0, 1, 1], [], []>} : vector<16x144xbf16>, vector<144x128xbf16>, vector<16x128xf32> -> vector<16x128xf32>
    %c0_5 = arith.constant 0 : index
    %c0_6 = arith.constant 0 : index
    %c0_7 = arith.constant 0 : index
    %7 = vector.load %arg5[%c0_5, %c0_6, %c0_7] : memref<1x16x128xf32, #tpu.memory_space<vmem>>, vector<1x16x128xf32>
    %8 = vector.shape_cast %7 : vector<1x16x128xf32> to vector<16x128xf32>
    %9 = vector.shape_cast %6 : vector<16x128xf32> to vector<1x16x128xf32>
    tpu.vector_store %arg5[%c0_5, %c0_6, %c0_7], %9 {strides = array<i32>} : memref<1x16x128xf32, #tpu.memory_space<vmem>>, vector<1x16x128xf32>,
    %c0_8 = arith.constant 0 : index
    %c0_9 = arith.constant 0 : index
    %c0_10 = arith.constant 0 : index
    %c0_11 = arith.constant 0 : index
    %10 = vector.load %arg6[%c0_8, %c0_9, %c0_10, %c0_11] : memref<1x1x16x1xf32, #tpu.memory_space<vmem>>, vector<1x1x16x1xf32>
    %11 = vector.shape_cast %10 : vector<1x1x16x1xf32> to vector<16x1xf32>
    %cst_12 = arith.constant dense<0.000000e+00> : vector<16xf32>
    %12 = vector.multi_reduction <add>, %6, %cst_12 [1] : vector<16x128xf32> to vector<16xf32>
    %13 = vector.shape_cast %12 : vector<16xf32> to vector<16x1xf32>
    %14 = arith.addf %11, %13 : vector<16x1xf32>
    %c0_13 = arith.constant 0 : index
    %c0_14 = arith.constant 0 : index
    %c0_15 = arith.constant 0 : index
    %c0_16 = arith.constant 0 : index
    %15 = vector.load %arg6[%c0_13, %c0_14, %c0_15, %c0_16] : memref<1x1x16x1xf32, #tpu.memory_space<vmem>>, vector<1x1x16x1xf32>
    %16 = vector.shape_cast %15 : vector<1x1x16x1xf32> to vector<16x1xf32>
    %17 = vector.shape_cast %14 : vector<16x1xf32> to vector<1x1x16x1xf32>
    tpu.vector_store %arg6[%c0_13, %c0_14, %c0_15, %c0_16], %17 {strides = array<i32>} : memref<1x1x16x1xf32, #tpu.memory_space<vmem>>, vector<1x1x16x1xf32>,
    %c0_17 = arith.constant 0 : index
    %c0_18 = arith.constant 0 : index
    %c0_19 = arith.constant 0 : index
    %c0_20 = arith.constant 0 : index
    %18 = vector.load %arg7[%c0_17, %c0_18, %c0_19, %c0_20] : memref<1x1x16x1xf32, #tpu.memory_space<vmem>>, vector<1x1x16x1xf32>
    %19 = vector.shape_cast %18 : vector<1x1x16x1xf32> to vector<16x1xf32>
    %20 = arith.mulf %6, %6 : vector<16x128xf32>
    %cst_21 = arith.constant dense<0.000000e+00> : vector<16xf32>
    %21 = vector.multi_reduction <add>, %20, %cst_21 [1] : vector<16x128xf32> to vector<16xf32>
    %22 = vector.shape_cast %21 : vector<16xf32> to vector<16x1xf32>
    %23 = arith.addf %19, %22 : vector<16x1xf32>
    %c0_22 = arith.constant 0 : index
    %c0_23 = arith.constant 0 : index
    %c0_24 = arith.constant 0 : index
    %c0_25 = arith.constant 0 : index
    %24 = vector.load %arg7[%c0_22, %c0_23, %c0_24, %c0_25] : memref<1x1x16x1xf32, #tpu.memory_space<vmem>>, vector<1x1x16x1xf32>
    %25 = vector.shape_cast %24 : vector<1x1x16x1xf32> to vector<16x1xf32>
    %26 = vector.shape_cast %23 : vector<16x1xf32> to vector<1x1x16x1xf32>
    tpu.vector_store %arg7[%c0_22, %c0_23, %c0_24, %c0_25], %26 {strides = array<i32>} : memref<1x1x16x1xf32, #tpu.memory_space<vmem>>, vector<1x1x16x1xf32>,
    return
  }
  func.func @transform_0(%arg0: i32, %arg1: i32, %arg2: i32) -> (i32, i32, i32) {
    %c1_i32 = arith.constant 1 : i32
    %0 = arith.muli %arg1, %c1_i32 : i32
    %1 = arith.addi %0, %arg2 : i32
    %c0_i32 = arith.constant 0 : i32
    %c0_i32_0 = arith.constant 0 : i32
    return %arg0, %c0_i32, %1 : i32, i32, i32
  }
  func.func @transform_1(%arg0: i32, %arg1: i32, %arg2: i32) -> (i32, i32) {
    %c0_i32 = arith.constant 0 : i32
    %c0_i32_0 = arith.constant 0 : i32
    %c0_i32_1 = arith.constant 0 : i32
    return %c0_i32, %c0_i32_0 : i32, i32
  }
  func.func @transform_2(%arg0: i32, %arg1: i32, %arg2: i32) -> (i32, i32, i32) {
    %c1_i32 = arith.constant 1 : i32
    %0 = arith.muli %arg1, %c1_i32 : i32
    %1 = arith.addi %0, %arg2 : i32
    %c0_i32 = arith.constant 0 : i32
    %c0_i32_0 = arith.constant 0 : i32
    return %arg0, %c0_i32, %1 : i32, i32, i32
  }
  func.func @transform_3(%arg0: i32, %arg1: i32, %arg2: i32) -> (i32, i32, i32, i32) {
    %c0_i32 = arith.constant 0 : i32
    %c0_i32_0 = arith.constant 0 : i32
    %c0_i32_1 = arith.constant 0 : i32
    return %arg0, %arg1, %c0_i32, %c0_i32_0 : i32, i32, i32, i32
  }
  func.func @transform_4(%arg0: i32, %arg1: i32, %arg2: i32) -> (i32, i32, i32, i32) {
    %c0_i32 = arith.constant 0 : i32
    %c0_i32_0 = arith.constant 0 : i32
    %c0_i32_1 = arith.constant 0 : i32
    return %arg0, %arg1, %c0_i32, %c0_i32_0 : i32, i32, i32, i32
  }
}

module attributes {stable_mosaic.version = 11 : i64} {
  func.func @norm_kernel(%arg0: i32, %arg1: i32, %arg2: memref<1x16x128xf32, #tpu.memory_space<vmem>>, %arg3: memref<1x16x1xf32, #tpu.memory_space<vmem>>, %arg4: memref<1x16x1xf32, #tpu.memory_space<vmem>>, %arg5: memref<1x16x128xf32, #tpu.memory_space<vmem>>) attributes {dimension_semantics = [#tpu.dimension_semantics<parallel>, #tpu.dimension_semantics<parallel>], iteration_bounds = array<i64: 2, 2>, scalar_prefetch = 0 : i64, scratch_operands = 0 : i64, tpu.core_type = #tpu.core_type<tc>, window_params = [{transform_indices = @transform_0, window_bounds = array<i64: 1, 16, 128>}, {transform_indices = @transform_1, window_bounds = array<i64: 1, 16, 1>}, {transform_indices = @transform_2, window_bounds = array<i64: 1, 16, 1>}, {transform_indices = @transform_3, window_bounds = array<i64: 1, 16, 128>}]} {
    %c0 = arith.constant 0 : index
    %c0_0 = arith.constant 0 : index
    %c0_1 = arith.constant 0 : index
    %0 = vector.load %arg2[%c0, %c0_0, %c0_1] : memref<1x16x128xf32, #tpu.memory_space<vmem>>, vector<1x16x128xf32>
    %1 = vector.shape_cast %0 : vector<1x16x128xf32> to vector<16x128xf32>
    %c0_2 = arith.constant 0 : index
    %c0_3 = arith.constant 0 : index
    %c0_4 = arith.constant 0 : index
    %2 = vector.load %arg3[%c0_2, %c0_3, %c0_4] : memref<1x16x1xf32, #tpu.memory_space<vmem>>, vector<1x16x1xf32>
    %3 = vector.shape_cast %2 : vector<1x16x1xf32> to vector<16x1xf32>
    %4 = vector.broadcast %3 : vector<16x1xf32> to vector<16x128xf32>
    %5 = arith.mulf %1, %4 : vector<16x128xf32>
    %c0_5 = arith.constant 0 : index
    %c0_6 = arith.constant 0 : index
    %c0_7 = arith.constant 0 : index
    %6 = vector.load %arg4[%c0_5, %c0_6, %c0_7] : memref<1x16x1xf32, #tpu.memory_space<vmem>>, vector<1x16x1xf32>
    %7 = vector.shape_cast %6 : vector<1x16x1xf32> to vector<16x1xf32>
    %8 = vector.broadcast %7 : vector<16x1xf32> to vector<16x128xf32>
    %9 = arith.addf %5, %8 : vector<16x128xf32>
    %c0_8 = arith.constant 0 : index
    %c0_9 = arith.constant 0 : index
    %c0_10 = arith.constant 0 : index
    %10 = vector.load %arg5[%c0_8, %c0_9, %c0_10] : memref<1x16x128xf32, #tpu.memory_space<vmem>>, vector<1x16x128xf32>
    %11 = vector.shape_cast %10 : vector<1x16x128xf32> to vector<16x128xf32>
    %12 = vector.shape_cast %9 : vector<16x128xf32> to vector<1x16x128xf32>
    tpu.vector_store %arg5[%c0_8, %c0_9, %c0_10], %12 {strides = array<i32>} : memref<1x16x128xf32, #tpu.memory_space<vmem>>, vector<1x16x128xf32>,
    return
  }
  func.func @transform_0(%arg0: i32, %arg1: i32) -> (i32, i32, i32) {
    %c0_i32 = arith.constant 0 : i32
    %c0_i32_0 = arith.constant 0 : i32
    return %arg0, %c0_i32, %arg1 : i32, i32, i32
  }
  func.func @transform_1(%arg0: i32, %arg1: i32) -> (i32, i32, i32) {
    %c0_i32 = arith.constant 0 : i32
    %c0_i32_0 = arith.constant 0 : i32
    %c0_i32_1 = arith.constant 0 : i32
    return %arg0, %c0_i32, %c0_i32_0 : i32, i32, i32
  }
  func.func @transform_2(%arg0: i32, %arg1: i32) -> (i32, i32, i32) {
    %c0_i32 = arith.constant 0 : i32
    %c0_i32_0 = arith.constant 0 : i32
    %c0_i32_1 = arith.constant 0 : i32
    return %arg0, %c0_i32, %c0_i32_0 : i32, i32, i32
  }
  func.func @transform_3(%arg0: i32, %arg1: i32) -> (i32, i32, i32) {
    %c0_i32 = arith.constant 0 : i32
    %c0_i32_0 = arith.constant 0 : i32
    return %arg0, %c0_i32, %arg1 : i32, i32, i32
  }
}

</mosaic_0001>

<llo_original>
// kernel: conv3x3norm_forward.3
$region0: #{conv3x3norm_forward.3}
  #allocation0 [shape = 'u32[]', space=smem, size = 0x4, offset = 0x4, fixed_abs, tag = 'smem constant byte address 0x4 - core index']
  #allocation1 [shape = 'u32[72,128]{1,0:T(1,128)}', space=vmem, size = 0x9000, scoped, tag = 'internal scratch']
  %s0 = inlined_call_operand.vmem [shape: f32[2,16,256], index: 0, kind: input, shape index: {}, may-alias: {0,3}]
  %s1 = inlined_call_operand.vmem [shape: f32[2,16,1], index: 1, kind: input, shape index: {}]
  %s2 = inlined_call_operand.vmem [shape: f32[2,16,1], index: 2, kind: input, shape index: {}]
  %s3 = inlined_call_operand.vmem [shape: f32[2,16,256], index: 3, kind: output, shape index: {}, may-alias: {0,3}]
  %s4 = sld [smem:[#allocation0]]
  $region117: #{conv3x3norm_forward.3} parent=0
    _
  %s6 = ssub.s32 1, %s4
  %s7 = scalar_select 0, %s6, %s4
  $region1: #{conv3x3norm_forward.3} parent=0
    #allocation2 [shape = 'u8[16384]{0}', space=vmem, size = 0x4000, scoped, tag = 'input window, operand 0']
    #allocation3 [shape = 'u8[16384]{0}', space=vmem, size = 0x4000, scoped, tag = 'output window, operand 0']
    loop: start=0, step=1, limit=6
    $region2: #{conv3x3norm_forward.3} parent=1 // loop_pre_header
      _
    $region3: #{conv3x3norm_forward.3} parent=1 // loop_header
      %s9 = sphi 0, %s13
      %p10 = scmp.ge.s32.totalorder %s9, 6
      %s16 = sphi 0, %s28
      %s17 = sphi 0, %s24
      %s18 = sphi 0, %s16
      %s19 = sphi 0, %s17
      %s20 = sphi 0, %s18
      %s21 = sphi 0, %s19
      %s33 = sphi 0, %s35
      %s36 = sphi 0, %s33
      %s37 = sphi 0, %s36
      %s53 = sphi 0, %s37
      %s59 = sphi 0, %s61
      %s62 = sphi 0, %s59
      %s63 = sphi 0, %s62
      %s79 = sphi 0, %s63
      %s85 = sphi 0, %s87
      %s88 = sphi 0, %s85
      %s89 = sphi 0, %s88
      %s105 = sphi 0, %s89
      %s113 = sphi 0, %s115
      %s116 = sphi 0, %s113
      %s117 = sphi 0, %s116
      %s133 = sphi 0, %s117
    $region4: #{conv3x3norm_forward.3} parent=1 // loop_header_branch
      %12 = sbr.rel (%p10) target = $region8
    $region5: #{conv3x3norm_forward.3} parent=1 // loop_body
      %s14 = ssub.s32 %s9, 1
      %s15 = ssub.s32 %s9, 2
      %s22 = sadd.s32 1, %s17
      %p23 = scmp.ge.s32.totalorder %s22, 2
      %s24 = scalar_select %p23, 0, %s22
      %s25 = sadd.s32 1, %s16
      %s26 = scalar_select %p23, %s25, %s16
      %p27 = scmp.ge.s32.totalorder %s26, 2
      %s28 = scalar_select %p27, 0, %s26
      %s29 = ssub.s32 %s16, %s28
      %s30 = ssub.s32 %s17, %s24
      %s31 = sor.u32 %s29, %s30
      %p32 = scmp.eq.s32.totalorder %s31, 0
      %s34 = sadd.s32 %s33, 1
      %s35 = scalar_select %p32, %s33, %s34
      %p38 = pneg %p32
      %p39 = scmp.eq.s32.totalorder %s9, 3
      %p40 = por %p38, %p39
      %p41 = scmp.ne.s32.totalorder %s33, %s36
      %p42 = scmp.eq.s32.totalorder %s9, 0
      %p43 = por %p41, %p42
      %p44 = scmp.ne.s32.totalorder %s33, %s36
      %p45 = scmp.eq.s32.totalorder %s14, 3
      %p46 = por %p44, %p45
      %p47 = scmp.ne.s32.totalorder %s36, %s37
      %p48 = scmp.eq.s32.totalorder %s14, 0
      %p49 = por %p47, %p48
      %p50 = scmp.ne.s32.totalorder %s36, %s37
      %p51 = scmp.eq.s32.totalorder %s15, 3
      %p52 = por %p50, %p51
      %p54 = scmp.ne.s32.totalorder %s37, %s53
      %p55 = scmp.eq.s32.totalorder %s15, 0
      %p56 = por %p54, %p55
      %s57 = ssub.s32 %s16, %s28
      %p58 = scmp.eq.s32.totalorder %s57, 0
      %s60 = sadd.s32 %s59, 1
      %s61 = scalar_select %p58, %s59, %s60
      %p64 = pneg %p58
      %p65 = scmp.eq.s32.totalorder %s9, 3
      %p66 = por %p64, %p65
      %p67 = scmp.ne.s32.totalorder %s59, %s62
      %p68 = scmp.eq.s32.totalorder %s9, 0
      %p69 = por %p67, %p68
      %p70 = scmp.ne.s32.totalorder %s59, %s62
      %p71 = scmp.eq.s32.totalorder %s14, 3
      %p72 = por %p70, %p71
      %p73 = scmp.ne.s32.totalorder %s62, %s63
      %p74 = scmp.eq.s32.totalorder %s14, 0
      %p75 = por %p73, %p74
      %p76 = scmp.ne.s32.totalorder %s62, %s63
      %p77 = scmp.eq.s32.totalorder %s15, 3
      %p78 = por %p76, %p77
      %p80 = scmp.ne.s32.totalorder %s63, %s79
      %p81 = scmp.eq.s32.totalorder %s15, 0
      %p82 = por %p80, %p81
      %s83 = ssub.s32 %s16, %s28
      %p84 = scmp.eq.s32.totalorder %s83, 0
      %s86 = sadd.s32 %s85, 1
      %s87 = scalar_select %p84, %s85, %s86
      %p90 = pneg %p84
      %p91 = scmp.eq.s32.totalorder %s9, 3
      %p92 = por %p90, %p91
      %p93 = scmp.ne.s32.totalorder %s85, %s88
      %p94 = scmp.eq.s32.totalorder %s9, 0
      %p95 = por %p93, %p94
      %p96 = scmp.ne.s32.totalorder %s85, %s88
      %p97 = scmp.eq.s32.totalorder %s14, 3
      %p98 = por %p96, %p97
      %p99 = scmp.ne.s32.totalorder %s88, %s89
      %p100 = scmp.eq.s32.totalorder %s14, 0
      %p101 = por %p99, %p100
      %p102 = scmp.ne.s32.totalorder %s88, %s89
      %p103 = scmp.eq.s32.totalorder %s15, 3
      %p104 = por %p102, %p103
      %p106 = scmp.ne.s32.totalorder %s89, %s105
      %p107 = scmp.eq.s32.totalorder %s15, 0
      %p108 = por %p106, %p107
      %s109 = ssub.s32 %s16, %s28
      %s110 = ssub.s32 %s17, %s24
      %s111 = sor.u32 %s109, %s110
      %p112 = scmp.eq.s32.totalorder %s111, 0
      %s114 = sadd.s32 %s113, 1
      %s115 = scalar_select %p112, %s113, %s114
      %p118 = pneg %p112
      %p119 = scmp.eq.s32.totalorder %s9, 3
      %p120 = por %p118, %p119
      %p121 = scmp.ne.s32.totalorder %s113, %s116
      %p122 = scmp.eq.s32.totalorder %s9, 0
      %p123 = por %p121, %p122
      %p124 = scmp.ne.s32.totalorder %s113, %s116
      %p125 = scmp.eq.s32.totalorder %s14, 3
      %p126 = por %p124, %p125
      %p127 = scmp.ne.s32.totalorder %s116, %s117
      %p128 = scmp.eq.s32.totalorder %s14, 0
      %p129 = por %p127, %p128
      %p130 = scmp.ne.s32.totalorder %s116, %s117
      %p131 = scmp.eq.s32.totalorder %s15, 3
      %p132 = por %p130, %p131
      %p134 = scmp.ne.s32.totalorder %s117, %s133
      %p135 = scmp.eq.s32.totalorder %s15, 0
      %p136 = por %p134, %p135
      %p137 = scmp.le.s32.totalorder 1, %s9
      %p138 = scmp.lt.s32.totalorder %s9, 5
      %p139 = pnand %p137, %p138
      %p140 = pneg %p139
      // Predicated region
      $region9: #{conv3x3norm_forward.3} parent=5 // pred_check
        _
      $region10: #{conv3x3norm_forward.3} parent=5 // pred_check_branch
        %142 = sbr.rel (%p139) target = $region12
      $region11: #{conv3x3norm_forward.3} parent=5 // pred_region
        %s143 = ssub.s32 %s9, 1
      $region12: #{conv3x3norm_forward.3} parent=5 // pred_fallthru
        _
      %p144 = scmp.lt.s32.totalorder %s9, 4
      // Predicated region
      $region13: #{conv3x3norm_forward.3} parent=5 // pred_check
        %p145 = pneg %p144
      $region14: #{conv3x3norm_forward.3} parent=5 // pred_check_branch
        %147 = sbr.rel (%p145) target = $region16
      $region15: #{conv3x3norm_forward.3} parent=5 // pred_region
        // Predicated region
        $region17: #{conv3x3norm_forward.3} parent=15 // pred_check
          %p148 = pneg %p43
        $region18: #{conv3x3norm_forward.3} parent=15 // pred_check_branch
          %150 = sbr.rel (%p148) target = $region20
        $region19: #{conv3x3norm_forward.3} parent=15 // pred_region
          %s151 = sand.u32 %s33, 1
          %s152 = sand.u32 %s33, 1
          %s153 = smul.addr %s152, 16
          %s154 = scalar_lea.vmem [#allocation2], %s153
          %s155 = smul.addr %s16, 4
          %s156 = sadd.s32 %s17, %s155
          %s157 = smul.addr %s156, 8
          %s158 = scalar_lea.vmem %s0, %s157
          // Predicated region
          $region21: #{conv3x3norm_forward.3} parent=19 // pred_check
            _
          $region22: #{conv3x3norm_forward.3} parent=19 // pred_check_branch
            %160 = sbr.rel (0) target = $region24
          $region23: #{conv3x3norm_forward.3} parent=19 // pred_region
            // Predicated region
            $region25: #{conv3x3norm_forward.3} parent=23 // pred_check
              _
            $region26: #{conv3x3norm_forward.3} parent=23 // pred_check_branch
              %162 = sbr.rel (0) target = $region28
            $region27: #{conv3x3norm_forward.3} parent=23 // pred_region
              // Predicated region
              $region40: #{conv3x3norm_forward.3} parent=27 // pred_check
                _
              $region41: #{conv3x3norm_forward.3} parent=27 // pred_check_branch
                %180 = sbr.rel (0) target = $region43
              $region42: #{conv3x3norm_forward.3} parent=27 // pred_region
                loop: start=0, step=1, limit=1
                $region44: #{conv3x3norm_forward.3} parent=42 // loop_pre_header
                  _
                $region45: #{conv3x3norm_forward.3} parent=42 // loop_header
                  %s182 = sphi 0, %s186
                  %p183 = scmp.ge.s32.totalorder %s182, 1
                  %s187 = sphi %s158, %s158
                  %s188 = sphi %s154, %s154
                $region46: #{conv3x3norm_forward.3} parent=42 // loop_header_branch
                  %185 = sbr.rel (%p183) target = $region50
                $region47: #{conv3x3norm_forward.3} parent=42 // loop_body
                  %v189 = vld [vmem:[%s187] sm:$0xff]
                  %190 = vst [vmem:[%s188] sm:$0xff] %v189
                  %v191 = vld [vmem:[%s187 + $0x10] sm:$0xff]
                  %192 = vst [vmem:[%s188 + $0x8] sm:$0xff] %v191
                $region48: #{conv3x3norm_forward.3} parent=42 // loop_footer
                  %s186 = sadd.s32 1, %s182
                $region49: #{conv3x3norm_forward.3} parent=42 // loop_footer_branch
                  %181 = sbr.rel target = $region45
                $region50: #{conv3x3norm_forward.3} parent=42 // loop_exit
                  _
              $region43: #{conv3x3norm_forward.3} parent=27 // pred_fallthru
                _
              // Predicated region
              $region51: #{conv3x3norm_forward.3} parent=27 // pred_check
                _
              $region52: #{conv3x3norm_forward.3} parent=27 // pred_check_branch
                %194 = sbr.rel target = $region54
              $region53: #{conv3x3norm_forward.3} parent=27 // pred_region
                _
              $region54: #{conv3x3norm_forward.3} parent=27 // pred_fallthru
                _
            $region28: #{conv3x3norm_forward.3} parent=23 // pred_fallthru
              _
            // Predicated region
            $region29: #{conv3x3norm_forward.3} parent=23 // pred_check
              _
            $region30: #{conv3x3norm_forward.3} parent=23 // pred_check_branch
              %164 = sbr.rel target = $region32
            $region31: #{conv3x3norm_forward.3} parent=23 // pred_region
              %s166 = ssub.s32 256, 1
              loop: start=0, step=1, limit=1
              $region33: #{conv3x3norm_forward.3} parent=31 // loop_pre_header
                _
              $region34: #{conv3x3norm_forward.3} parent=31 // loop_header
                %s168 = sphi 0, %s172
                %p169 = scmp.ge.s32.totalorder %s168, 1
                %s173 = sphi %s158, %s158
                %s174 = sphi %s154, %s154
              $region35: #{conv3x3norm_forward.3} parent=31 // loop_header_branch
                %171 = sbr.rel (%p169) target = $region39
              $region36: #{conv3x3norm_forward.3} parent=31 // loop_body
                %v175 = vld [vmem:[%s173] sm:%s166]
                %176 = vst [vmem:[%s174] sm:%s166] %v175
                %v177 = vld [vmem:[%s173 + $0x10] sm:%s166]
                %178 = vst [vmem:[%s174 + $0x8] sm:%s166] %v177
              $region37: #{conv3x3norm_forward.3} parent=31 // loop_footer
                %s172 = sadd.s32 1, %s168
              $region38: #{conv3x3norm_forward.3} parent=31 // loop_footer_branch
                %167 = sbr.rel target = $region34
              $region39: #{conv3x3norm_forward.3} parent=31 // loop_exit
                _
            $region32: #{conv3x3norm_forward.3} parent=23 // pred_fallthru
              _
          $region24: #{conv3x3norm_forward.3} parent=19 // pred_fallthru
            _
          %195 = vnop
        $region20: #{conv3x3norm_forward.3} parent=15 // pred_fallthru
          _
        // Predicated region
        $region55: #{conv3x3norm_forward.3} parent=15 // pred_check
          %p196 = pneg %p69
        $region56: #{conv3x3norm_forward.3} parent=15 // pred_check_branch
          %198 = sbr.rel (%p196) target = $region58
        $region57: #{conv3x3norm_forward.3} parent=15 // pred_region
          %p199 = scmp.lt.s32.totalorder %s16, 1
          %s200 = scalar_select %p199, %s16, 1
          %s201 = smul.addr %s200, 2
          %s202 = smul.addr %s201, 8
          %s203 = scalar_lea.vmem %s1, %s202
        $region58: #{conv3x3norm_forward.3} parent=15 // pred_fallthru
          _
        // Predicated region
        $region59: #{conv3x3norm_forward.3} parent=15 // pred_check
          %p204 = pneg %p95
        $region60: #{conv3x3norm_forward.3} parent=15 // pred_check_branch
          %206 = sbr.rel (%p204) target = $region62
        $region61: #{conv3x3norm_forward.3} parent=15 // pred_region
          %p207 = scmp.lt.s32.totalorder %s16, 1
          %s208 = scalar_select %p207, %s16, 1
          %s209 = smul.addr %s208, 2
          %s210 = smul.addr %s209, 8
          %s211 = scalar_lea.vmem %s2, %s210
        $region62: #{conv3x3norm_forward.3} parent=15 // pred_fallthru
          _
      $region16: #{conv3x3norm_forward.3} parent=5 // pred_fallthru
        _
      %p212 = scmp.le.s32.totalorder 1, %s9
      %p213 = scmp.lt.s32.totalorder %s9, 5
      %p214 = pnand %p212, %p213
      %p215 = pneg %p214
      // Predicated region
      $region63: #{conv3x3norm_forward.3} parent=5 // pred_check
        _
      $region64: #{conv3x3norm_forward.3} parent=5 // pred_check_branch
        %217 = sbr.rel (%p214) target = $region66
      $region65: #{conv3x3norm_forward.3} parent=5 // pred_region
        %s218 = ssub.s32 %s9, 1
        %s219 = sand.u32 %s36, 1
        %s220 = sand.u32 %s36, 1
        %s221 = smul.addr %s220, 16
        %s222 = scalar_lea.vmem [#allocation2], %s221
        // Predicated region
        $region67: #{conv3x3norm_forward.3} parent=65 // pred_check
          %p223 = pneg %p49
        $region68: #{conv3x3norm_forward.3} parent=65 // pred_check_branch
          %225 = sbr.rel (%p223) target = $region70
        $region69: #{conv3x3norm_forward.3} parent=65 // pred_region
          _
        $region70: #{conv3x3norm_forward.3} parent=65 // pred_fallthru
          _
        %s226 = sand.u32 %s36, 1
        %s227 = sand.u32 %s36, 1
        %s228 = smul.addr %s227, 16
        %s229 = scalar_lea.vmem [#allocation2], %s228
        %p230 = pneg %p49
        %p231 = pneg %p46
        %p232 = scmp.lt.s32.totalorder %s18, 1
        %s233 = scalar_select %p232, %s18, 1
        %s234 = smul.addr %s233, 2
        %s235 = smul.addr %s234, 8
        %s236 = scalar_lea.vmem %s1, %s235
        %p237 = pneg %p75
        %p238 = pneg %p72
        %p239 = scmp.lt.s32.totalorder %s18, 1
        %s240 = scalar_select %p239, %s18, 1
        %s241 = smul.addr %s240, 2
        %s242 = smul.addr %s241, 8
        %s243 = scalar_lea.vmem %s2, %s242
        %p244 = pneg %p101
        %p245 = pneg %p98
        %p246 = pneg %p129
        %p247 = pneg %p126
        %s248 = sand.u32 %s116, 1
        %s249 = sand.u32 %s116, 1
        %s250 = smul.addr %s249, 16
        %s251 = scalar_lea.vmem [#allocation3], %s250
        %p252 = scmp.lt.s32.totalorder %s18, 1
        %s253 = scalar_select %p252, %s18, 1
        %s254 = smul.addr %s253, 2
        %s255 = smul.addr %s254, 8
        %s256 = scalar_lea.vmem %s1, %s255
        %p257 = scmp.lt.s32.totalorder %s18, 1
        %s258 = scalar_select %p257, %s18, 1
        %s259 = smul.addr %s258, 2
        %s260 = smul.addr %s259, 8
        %s261 = scalar_lea.vmem %s2, %s260
        %v262 = vld [vmem:[%s222] sm:$0xff]
        %v263 = vld [vmem:[%s222 + $0x8] sm:$0xff]
        %v264 = vld [vmem:[%s256] sm:$0xff]
        %v265 = vld [vmem:[%s256 + $0x8] sm:$0xff]
        %267 = vset.pattern.permute.xlu0 0
        %268 = vperm.xlu0 %267, %v264
        %v269 = vpop.permute.xlu0 %268
        %272 = vset.pattern.permute.xlu0 0
        %273 = vperm.xlu0 %272, %v265
        %v274 = vpop.permute.xlu0 %273
        %v276 = vmul.f32 %v262, %v269
        %v277 = vmul.f32 %v263, %v274
        %v278 = vld [vmem:[%s261] sm:$0xff]
        %v279 = vld [vmem:[%s261 + $0x8] sm:$0xff]
        %281 = vset.pattern.permute.xlu0 0
        %282 = vperm.xlu0 %281, %v278
        %v283 = vpop.permute.xlu0 %282
        %286 = vset.pattern.permute.xlu0 0
        %287 = vperm.xlu0 %286, %v279
        %v288 = vpop.permute.xlu0 %287
        %v290 = vadd.f32 %v276, %v283
        %v291 = vadd.f32 %v277, %v288
        %292 = vst [vmem:[%s251] sm:$0xff] %v290
        %293 = vst [vmem:[%s251 + $0x8] sm:$0xff] %v291
        %s294 = sand.u32 %s116, 1
        %s295 = sand.u32 %s116, 1
        %s296 = smul.addr %s295, 16
        %s297 = scalar_lea.vmem [#allocation3], %s296
        // Predicated region
        $region71: #{conv3x3norm_forward.3} parent=65 // pred_check
          %p298 = pneg %p126
        $region72: #{conv3x3norm_forward.3} parent=65 // pred_check_branch
          %300 = sbr.rel (%p298) target = $region74
        $region73: #{conv3x3norm_forward.3} parent=65 // pred_region
          %s301 = smul.addr %s18, 4
          %s302 = sadd.s32 %s19, %s301
          %s303 = smul.addr %s302, 8
          %s304 = scalar_lea.vmem %s3, %s303
          // Predicated region
          $region75: #{conv3x3norm_forward.3} parent=73 // pred_check
            _
          $region76: #{conv3x3norm_forward.3} parent=73 // pred_check_branch
            %306 = sbr.rel (0) target = $region78
          $region77: #{conv3x3norm_forward.3} parent=73 // pred_region
            // Predicated region
            $region79: #{conv3x3norm_forward.3} parent=77 // pred_check
              _
            $region80: #{conv3x3norm_forward.3} parent=77 // pred_check_branch
              %308 = sbr.rel (0) target = $region82
            $region81: #{conv3x3norm_forward.3} parent=77 // pred_region
              // Predicated region
              $region94: #{conv3x3norm_forward.3} parent=81 // pred_check
                _
              $region95: #{conv3x3norm_forward.3} parent=81 // pred_check_branch
                %326 = sbr.rel (0) target = $region97
              $region96: #{conv3x3norm_forward.3} parent=81 // pred_region
                loop: start=0, step=1, limit=1
                $region98: #{conv3x3norm_forward.3} parent=96 // loop_pre_header
                  _
                $region99: #{conv3x3norm_forward.3} parent=96 // loop_header
                  %s328 = sphi 0, %s332
                  %p329 = scmp.ge.s32.totalorder %s328, 1
                  %s333 = sphi %s297, %s297
                  %s334 = sphi %s304, %s304
                $region100: #{conv3x3norm_forward.3} parent=96 // loop_header_branch
                  %331 = sbr.rel (%p329) target = $region104
                $region101: #{conv3x3norm_forward.3} parent=96 // loop_body
                  %v335 = vld [vmem:[%s333] sm:$0xff]
                  %336 = vst [vmem:[%s334] sm:$0xff] %v335
                  %v337 = vld [vmem:[%s333 + $0x8] sm:$0xff]
                  %338 = vst [vmem:[%s334 + $0x10] sm:$0xff] %v337
                $region102: #{conv3x3norm_forward.3} parent=96 // loop_footer
                  %s332 = sadd.s32 1, %s328
                $region103: #{conv3x3norm_forward.3} parent=96 // loop_footer_branch
                  %327 = sbr.rel target = $region99
                $region104: #{conv3x3norm_forward.3} parent=96 // loop_exit
                  _
              $region97: #{conv3x3norm_forward.3} parent=81 // pred_fallthru
                _
              // Predicated region
              $region105: #{conv3x3norm_forward.3} parent=81 // pred_check
                _
              $region106: #{conv3x3norm_forward.3} parent=81 // pred_check_branch
                %340 = sbr.rel target = $region108
              $region107: #{conv3x3norm_forward.3} parent=81 // pred_region
                _
              $region108: #{conv3x3norm_forward.3} parent=81 // pred_fallthru
                _
            $region82: #{conv3x3norm_forward.3} parent=77 // pred_fallthru
              _
            // Predicated region
            $region83: #{conv3x3norm_forward.3} parent=77 // pred_check
              _
            $region84: #{conv3x3norm_forward.3} parent=77 // pred_check_branch
              %310 = sbr.rel target = $region86
            $region85: #{conv3x3norm_forward.3} parent=77 // pred_region
              %s312 = ssub.s32 256, 1
              loop: start=0, step=1, limit=1
              $region87: #{conv3x3norm_forward.3} parent=85 // loop_pre_header
                _
              $region88: #{conv3x3norm_forward.3} parent=85 // loop_header
                %s314 = sphi 0, %s318
                %p315 = scmp.ge.s32.totalorder %s314, 1
                %s319 = sphi %s297, %s297
                %s320 = sphi %s304, %s304
              $region89: #{conv3x3norm_forward.3} parent=85 // loop_header_branch
                %317 = sbr.rel (%p315) target = $region93
              $region90: #{conv3x3norm_forward.3} parent=85 // loop_body
                %v321 = vld [vmem:[%s319] sm:%s312]
                %322 = vst [vmem:[%s320] sm:%s312] %v321
                %v323 = vld [vmem:[%s319 + $0x8] sm:%s312]
                %324 = vst [vmem:[%s320 + $0x10] sm:%s312] %v323
              $region91: #{conv3x3norm_forward.3} parent=85 // loop_footer
                %s318 = sadd.s32 1, %s314
              $region92: #{conv3x3norm_forward.3} parent=85 // loop_footer_branch
                %313 = sbr.rel target = $region88
              $region93: #{conv3x3norm_forward.3} parent=85 // loop_exit
                _
            $region86: #{conv3x3norm_forward.3} parent=77 // pred_fallthru
              _
          $region78: #{conv3x3norm_forward.3} parent=73 // pred_fallthru
            _
          %341 = vnop
        $region74: #{conv3x3norm_forward.3} parent=65 // pred_fallthru
          _
      $region66: #{conv3x3norm_forward.3} parent=5 // pred_fallthru
        _
      %p342 = scmp.le.s32.totalorder 2, %s9
      // Predicated region
      $region109: #{conv3x3norm_forward.3} parent=5 // pred_check
        %p343 = pneg %p342
      $region110: #{conv3x3norm_forward.3} parent=5 // pred_check_branch
        %345 = sbr.rel (%p343) target = $region112
      $region111: #{conv3x3norm_forward.3} parent=5 // pred_region
        %s346 = ssub.s32 %s9, 2
        // Predicated region
        $region113: #{conv3x3norm_forward.3} parent=111 // pred_check
          %p347 = pneg %p132
        $region114: #{conv3x3norm_forward.3} parent=111 // pred_check_branch
          %349 = sbr.rel (%p347) target = $region116
        $region115: #{conv3x3norm_forward.3} parent=111 // pred_region
          %s350 = sand.u32 %s117, 1
          %s351 = sand.u32 %s117, 1
          %s352 = smul.addr %s351, 16
          %s353 = scalar_lea.vmem [#allocation3], %s352
        $region116: #{conv3x3norm_forward.3} parent=111 // pred_fallthru
          _
      $region112: #{conv3x3norm_forward.3} parent=5 // pred_fallthru
        _
    $region6: #{conv3x3norm_forward.3} parent=1 // loop_footer
      %s13 = sadd.s32 1, %s9
    $region7: #{conv3x3norm_forward.3} parent=1 // loop_footer_branch
      %8 = sbr.rel target = $region3
    $region8: #{conv3x3norm_forward.3} parent=1 // loop_exit
      _

// kernel: conv3x3norm_forward.2
$region0: #{conv3x3norm_forward.2}
  #allocation0 [shape = 'u32[]', space=smem, size = 0x4, offset = 0x4, fixed_abs, tag = 'smem constant byte address 0x4 - core index']
  #allocation1 [shape = 'u32[72,128]{1,0:T(1,128)}', space=vmem, size = 0x9000, scoped, tag = 'internal scratch']
  %s0 = inlined_call_operand.vmem [shape: bf16[2,144,256], index: 0, kind: input, shape index: {}]
  %s1 = inlined_call_operand.vmem [shape: bf16[16,144], index: 1, kind: input, shape index: {}]
  %s2 = inlined_call_operand.vmem [shape: f32[2,16,256], index: 2, kind: output, shape index: {0}]
  %s3 = inlined_call_operand.vmem [shape: f32[2,2,16,1], index: 3, kind: output, shape index: {1}]
  %s4 = inlined_call_operand.vmem [shape: f32[2,2,16,1], index: 4, kind: output, shape index: {2}]
  %5 = xla_tuple %s2, %s3, %s4
  %s6 = sld [smem:[#allocation0]]
  $region136: #{conv3x3norm_forward.2} parent=0
    _
  %s8 = ssub.s32 1, %s6
  %s9 = scalar_select 0, %s8, %s6
  $region1: #{conv3x3norm_forward.2} parent=0
    #allocation2 [shape = 'u8[73728]{0}', space=vmem, size = 0x12000, scoped, tag = 'input window, operand 0']
    #allocation3 [shape = 'u8[16384]{0}', space=vmem, size = 0x4000, scoped, tag = 'output window, operand 0']
    loop: start=0, step=1, limit=6
    $region2: #{conv3x3norm_forward.2} parent=1 // loop_pre_header
      _
    $region3: #{conv3x3norm_forward.2} parent=1 // loop_header
      %s11 = sphi 0, %s15
      %p12 = scmp.ge.s32.totalorder %s11, 6
      %s18 = sphi 0, %s37
      %s19 = sphi 0, %s33
      %s20 = sphi 0, %s29
      %s21 = sphi 0, %s18
      %s22 = sphi 0, %s19
      %s23 = sphi 0, %s20
      %s24 = sphi 0, %s21
      %s25 = sphi 0, %s22
      %s26 = sphi 0, %s23
      %s44 = sphi 0, %s46
      %s47 = sphi 0, %s44
      %s48 = sphi 0, %s47
      %s64 = sphi 0, %s48
      %s68 = sphi 0, %s68
      %s70 = sphi 0, %s68
      %s71 = sphi 0, %s70
      %s85 = sphi 0, %s71
      %s95 = sphi 0, %s97
      %s98 = sphi 0, %s95
      %s99 = sphi 0, %s98
      %s115 = sphi 0, %s99
      %s123 = sphi 0, %s125
      %s126 = sphi 0, %s123
      %s127 = sphi 0, %s126
      %s143 = sphi 0, %s127
      %s151 = sphi 0, %s153
      %s154 = sphi 0, %s151
      %s155 = sphi 0, %s154
      %s171 = sphi 0, %s155
    $region4: #{conv3x3norm_forward.2} parent=1 // loop_header_branch
      %14 = sbr.rel (%p12) target = $region8
    $region5: #{conv3x3norm_forward.2} parent=1 // loop_body
      %s16 = ssub.s32 %s11, 1
      %s17 = ssub.s32 %s11, 2
      %s27 = sadd.s32 1, %s20
      %p28 = scmp.ge.s32.totalorder %s27, 1
      %s29 = scalar_select %p28, 0, %s27
      %s30 = sadd.s32 1, %s19
      %s31 = scalar_select %p28, %s30, %s19
      %p32 = scmp.ge.s32.totalorder %s31, 2
      %s33 = scalar_select %p32, 0, %s31
      %s34 = sadd.s32 1, %s18
      %s35 = scalar_select %p32, %s34, %s18
      %p36 = scmp.ge.s32.totalorder %s35, 2
      %s37 = scalar_select %p36, 0, %s35
      %s38 = sadd.s32 %s19, %s20
      %s39 = sadd.s32 %s33, %s29
      %s40 = ssub.s32 %s18, %s37
      %s41 = ssub.s32 %s38, %s39
      %s42 = sor.u32 %s40, %s41
      %p43 = scmp.eq.s32.totalorder %s42, 0
      %s45 = sadd.s32 %s44, 1
      %s46 = scalar_select %p43, %s44, %s45
      %p49 = pneg %p43
      %p50 = scmp.eq.s32.totalorder %s11, 3
      %p51 = por %p49, %p50
      %p52 = scmp.ne.s32.totalorder %s44, %s47
      %p53 = scmp.eq.s32.totalorder %s11, 0
      %p54 = por %p52, %p53
      %p55 = scmp.ne.s32.totalorder %s44, %s47
      %p56 = scmp.eq.s32.totalorder %s16, 3
      %p57 = por %p55, %p56
      %p58 = scmp.ne.s32.totalorder %s47, %s48
      %p59 = scmp.eq.s32.totalorder %s16, 0
      %p60 = por %p58, %p59
      %p61 = scmp.ne.s32.totalorder %s47, %s48
      %p62 = scmp.eq.s32.totalorder %s17, 3
      %p63 = por %p61, %p62
      %p65 = scmp.ne.s32.totalorder %s48, %s64
      %p66 = scmp.eq.s32.totalorder %s17, 0
      %p67 = por %p65, %p66
      %s69 = sadd.s32 %s68, 1
      %p72 = scmp.eq.s32.totalorder %s11, 3
      %p73 = scmp.ne.s32.totalorder %s68, %s70
      %p74 = scmp.eq.s32.totalorder %s11, 0
      %p75 = por %p73, %p74
      %p76 = scmp.ne.s32.totalorder %s68, %s70
      %p77 = scmp.eq.s32.totalorder %s16, 3
      %p78 = por %p76, %p77
      %p79 = scmp.ne.s32.totalorder %s70, %s71
      %p80 = scmp.eq.s32.totalorder %s16, 0
      %p81 = por %p79, %p80
      %p82 = scmp.ne.s32.totalorder %s70, %s71
      %p83 = scmp.eq.s32.totalorder %s17, 3
      %p84 = por %p82, %p83
      %p86 = scmp.ne.s32.totalorder %s71, %s85
      %p87 = scmp.eq.s32.totalorder %s17, 0
      %p88 = por %p86, %p87
      %s89 = sadd.s32 %s19, %s20
      %s90 = sadd.s32 %s33, %s29
      %s91 = ssub.s32 %s18, %s37
      %s92 = ssub.s32 %s89, %s90
      %s93 = sor.u32 %s91, %s92
      %p94 = scmp.eq.s32.totalorder %s93, 0
      %s96 = sadd.s32 %s95, 1
      %s97 = scalar_select %p94, %s95, %s96
      %p100 = pneg %p94
      %p101 = scmp.eq.s32.totalorder %s11, 3
      %p102 = por %p100, %p101
      %p103 = scmp.ne.s32.totalorder %s95, %s98
      %p104 = scmp.eq.s32.totalorder %s11, 0
      %p105 = por %p103, %p104
      %p106 = scmp.ne.s32.totalorder %s95, %s98
      %p107 = scmp.eq.s32.totalorder %s16, 3
      %p108 = por %p106, %p107
      %p109 = scmp.ne.s32.totalorder %s98, %s99
      %p110 = scmp.eq.s32.totalorder %s16, 0
      %p111 = por %p109, %p110
      %p112 = scmp.ne.s32.totalorder %s98, %s99
      %p113 = scmp.eq.s32.totalorder %s17, 3
      %p114 = por %p112, %p113
      %p116 = scmp.ne.s32.totalorder %s99, %s115
      %p117 = scmp.eq.s32.totalorder %s17, 0
      %p118 = por %p116, %p117
      %s119 = ssub.s32 %s18, %s37
      %s120 = ssub.s32 %s19, %s33
      %s121 = sor.u32 %s119, %s120
      %p122 = scmp.eq.s32.totalorder %s121, 0
      %s124 = sadd.s32 %s123, 1
      %s125 = scalar_select %p122, %s123, %s124
      %p128 = pneg %p122
      %p129 = scmp.eq.s32.totalorder %s11, 3
      %p130 = por %p128, %p129
      %p131 = scmp.ne.s32.totalorder %s123, %s126
      %p132 = scmp.eq.s32.totalorder %s11, 0
      %p133 = por %p131, %p132
      %p134 = scmp.ne.s32.totalorder %s123, %s126
      %p135 = scmp.eq.s32.totalorder %s16, 3
      %p136 = por %p134, %p135
      %p137 = scmp.ne.s32.totalorder %s126, %s127
      %p138 = scmp.eq.s32.totalorder %s16, 0
      %p139 = por %p137, %p138
      %p140 = scmp.ne.s32.totalorder %s126, %s127
      %p141 = scmp.eq.s32.totalorder %s17, 3
      %p142 = por %p140, %p141
      %p144 = scmp.ne.s32.totalorder %s127, %s143
      %p145 = scmp.eq.s32.totalorder %s17, 0
      %p146 = por %p144, %p145
      %s147 = ssub.s32 %s18, %s37
      %s148 = ssub.s32 %s19, %s33
      %s149 = sor.u32 %s147, %s148
      %p150 = scmp.eq.s32.totalorder %s149, 0
      %s152 = sadd.s32 %s151, 1
      %s153 = scalar_select %p150, %s151, %s152
      %p156 = pneg %p150
      %p157 = scmp.eq.s32.totalorder %s11, 3
      %p158 = por %p156, %p157
      %p159 = scmp.ne.s32.totalorder %s151, %s154
      %p160 = scmp.eq.s32.totalorder %s11, 0
      %p161 = por %p159, %p160
      %p162 = scmp.ne.s32.totalorder %s151, %s154
      %p163 = scmp.eq.s32.totalorder %s16, 3
      %p164 = por %p162, %p163
      %p165 = scmp.ne.s32.totalorder %s154, %s155
      %p166 = scmp.eq.s32.totalorder %s16, 0
      %p167 = por %p165, %p166
      %p168 = scmp.ne.s32.totalorder %s154, %s155
      %p169 = scmp.eq.s32.totalorder %s17, 3
      %p170 = por %p168, %p169
      %p172 = scmp.ne.s32.totalorder %s155, %s171
      %p173 = scmp.eq.s32.totalorder %s17, 0
      %p174 = por %p172, %p173
      %p175 = scmp.le.s32.totalorder 1, %s11
      %p176 = scmp.lt.s32.totalorder %s11, 5
      %p177 = pnand %p175, %p176
      %p178 = pneg %p177
      // Predicated region
      $region9: #{conv3x3norm_forward.2} parent=5 // pred_check
        _
      $region10: #{conv3x3norm_forward.2} parent=5 // pred_check_branch
        %180 = sbr.rel (%p177) target = $region12
      $region11: #{conv3x3norm_forward.2} parent=5 // pred_region
        %s181 = ssub.s32 %s11, 1
        // Predicated region
        $region13: #{conv3x3norm_forward.2} parent=11 // pred_check
          %p182 = pneg %p81
        $region14: #{conv3x3norm_forward.2} parent=11 // pred_check_branch
          %184 = sbr.rel (%p182) target = $region16
        $region15: #{conv3x3norm_forward.2} parent=11 // pred_region
          _
        $region16: #{conv3x3norm_forward.2} parent=11 // pred_fallthru
          _
      $region12: #{conv3x3norm_forward.2} parent=5 // pred_fallthru
        _
      %p185 = scmp.lt.s32.totalorder %s11, 4
      // Predicated region
      $region17: #{conv3x3norm_forward.2} parent=5 // pred_check
        %p186 = pneg %p185
      $region18: #{conv3x3norm_forward.2} parent=5 // pred_check_branch
        %188 = sbr.rel (%p186) target = $region20
      $region19: #{conv3x3norm_forward.2} parent=5 // pred_region
        // Predicated region
        $region21: #{conv3x3norm_forward.2} parent=19 // pred_check
          %p189 = pneg %p54
        $region22: #{conv3x3norm_forward.2} parent=19 // pred_check_branch
          %191 = sbr.rel (%p189) target = $region24
        $region23: #{conv3x3norm_forward.2} parent=19 // pred_region
          %s192 = sand.u32 %s44, 1
          %s193 = sand.u32 %s44, 1
          %s194 = smul.addr %s193, 72
          %s195 = scalar_lea.vmem [#allocation2], %s194
          %s196 = sadd.s32 %s19, %s20
          %s197 = smul.addr %s18, 36
          %s198 = sadd.s32 %s196, %s197
          %s199 = smul.addr %s198, 4
          %s200 = scalar_lea.vmem %s0, %s199
          // Predicated region
          $region25: #{conv3x3norm_forward.2} parent=23 // pred_check
            _
          $region26: #{conv3x3norm_forward.2} parent=23 // pred_check_branch
            %202 = sbr.rel (0) target = $region28
          $region27: #{conv3x3norm_forward.2} parent=23 // pred_region
            // Predicated region
            $region29: #{conv3x3norm_forward.2} parent=27 // pred_check
              _
            $region30: #{conv3x3norm_forward.2} parent=27 // pred_check_branch
              %204 = sbr.rel target = $region32
            $region31: #{conv3x3norm_forward.2} parent=27 // pred_region
              // Predicated region
              $region44: #{conv3x3norm_forward.2} parent=31 // pred_check
                _
              $region45: #{conv3x3norm_forward.2} parent=31 // pred_check_branch
                %254 = sbr.rel (0) target = $region47
              $region46: #{conv3x3norm_forward.2} parent=31 // pred_region
                loop: start=0, step=1, limit=1
                $region48: #{conv3x3norm_forward.2} parent=46 // loop_pre_header
                  _
                $region49: #{conv3x3norm_forward.2} parent=46 // loop_header
                  %s256 = sphi 0, %s260
                  %p257 = scmp.ge.s32.totalorder %s256, 1
                  %s261 = sphi %s200, %s200
                  %s262 = sphi %s195, %s195
                $region50: #{conv3x3norm_forward.2} parent=46 // loop_header_branch
                  %259 = sbr.rel (%p257) target = $region54
                $region51: #{conv3x3norm_forward.2} parent=46 // loop_body
                  _
                $region52: #{conv3x3norm_forward.2} parent=46 // loop_footer
                  %s260 = sadd.s32 1, %s256
                $region53: #{conv3x3norm_forward.2} parent=46 // loop_footer_branch
                  %255 = sbr.rel target = $region49
                $region54: #{conv3x3norm_forward.2} parent=46 // loop_exit
                  _
                %s264 = ssub.s32 16, 1
                loop: start=0, step=1, limit=1
                $region55: #{conv3x3norm_forward.2} parent=46 // loop_pre_header
                  _
                $region56: #{conv3x3norm_forward.2} parent=46 // loop_header
                  %s266 = sphi 0, %s270
                  %p267 = scmp.ge.s32.totalorder %s266, 1
                  %s271 = sphi %s200, %s200
                  %s272 = sphi %s195, %s195
                $region57: #{conv3x3norm_forward.2} parent=46 // loop_header_branch
                  %269 = sbr.rel (%p267) target = $region61
                $region58: #{conv3x3norm_forward.2} parent=46 // loop_body
                  %v273 = vld [vmem:[%s271] sm:%s264]
                  %274 = vst [vmem:[%s272] sm:%s264] %v273
                  %v275 = vld [vmem:[%s271 + $0x8] sm:%s264]
                  %276 = vst [vmem:[%s272 + $0x4] sm:%s264] %v275
                  %v277 = vld [vmem:[%s271 + $0x10] sm:%s264]
                  %278 = vst [vmem:[%s272 + $0x8] sm:%s264] %v277
                  %v279 = vld [vmem:[%s271 + $0x18] sm:%s264]
                  %280 = vst [vmem:[%s272 + $0xc] sm:%s264] %v279
                  %v281 = vld [vmem:[%s271 + $0x20] sm:%s264]
                  %282 = vst [vmem:[%s272 + $0x10] sm:%s264] %v281
                  %v283 = vld [vmem:[%s271 + $0x28] sm:%s264]
                  %284 = vst [vmem:[%s272 + $0x14] sm:%s264] %v283
                  %v285 = vld [vmem:[%s271 + $0x30] sm:%s264]
                  %286 = vst [vmem:[%s272 + $0x18] sm:%s264] %v285
                  %v287 = vld [vmem:[%s271 + $0x38] sm:%s264]
                  %288 = vst [vmem:[%s272 + $0x1c] sm:%s264] %v287
                  %v289 = vld [vmem:[%s271 + $0x40] sm:%s264]
                  %290 = vst [vmem:[%s272 + $0x20] sm:%s264] %v289
                  %v291 = vld [vmem:[%s271 + $0x48] sm:%s264]
                  %292 = vst [vmem:[%s272 + $0x24] sm:%s264] %v291
                  %v293 = vld [vmem:[%s271 + $0x50] sm:%s264]
                  %294 = vst [vmem:[%s272 + $0x28] sm:%s264] %v293
                  %v295 = vld [vmem:[%s271 + $0x58] sm:%s264]
                  %296 = vst [vmem:[%s272 + $0x2c] sm:%s264] %v295
                  %v297 = vld [vmem:[%s271 + $0x60] sm:%s264]
                  %298 = vst [vmem:[%s272 + $0x30] sm:%s264] %v297
                  %v299 = vld [vmem:[%s271 + $0x68] sm:%s264]
                  %300 = vst [vmem:[%s272 + $0x34] sm:%s264] %v299
                  %v301 = vld [vmem:[%s271 + $0x70] sm:%s264]
                  %302 = vst [vmem:[%s272 + $0x38] sm:%s264] %v301
                  %v303 = vld [vmem:[%s271 + $0x78] sm:%s264]
                  %304 = vst [vmem:[%s272 + $0x3c] sm:%s264] %v303
                  %v305 = vld [vmem:[%s271 + $0x80] sm:%s264]
                  %306 = vst [vmem:[%s272 + $0x40] sm:%s264] %v305
                  %v307 = vld [vmem:[%s271 + $0x88] sm:%s264]
                  %308 = vst [vmem:[%s272 + $0x44] sm:%s264] %v307
                $region59: #{conv3x3norm_forward.2} parent=46 // loop_footer
                  %s270 = sadd.s32 1, %s266
                $region60: #{conv3x3norm_forward.2} parent=46 // loop_footer_branch
                  %265 = sbr.rel target = $region56
                $region61: #{conv3x3norm_forward.2} parent=46 // loop_exit
                  _
              $region47: #{conv3x3norm_forward.2} parent=31 // pred_fallthru
                _
            $region32: #{conv3x3norm_forward.2} parent=27 // pred_fallthru
              _
            // Predicated region
            $region33: #{conv3x3norm_forward.2} parent=27 // pred_check
              _
            $region34: #{conv3x3norm_forward.2} parent=27 // pred_check_branch
              %206 = sbr.rel (0) target = $region36
            $region35: #{conv3x3norm_forward.2} parent=27 // pred_region
              %s208 = ssub.s32 16, 1
              loop: start=0, step=1, limit=1
              $region37: #{conv3x3norm_forward.2} parent=35 // loop_pre_header
                _
              $region38: #{conv3x3norm_forward.2} parent=35 // loop_header
                %s210 = sphi 0, %s214
                %p211 = scmp.ge.s32.totalorder %s210, 1
                %s215 = sphi %s200, %s200
                %s216 = sphi %s195, %s195
              $region39: #{conv3x3norm_forward.2} parent=35 // loop_header_branch
                %213 = sbr.rel (%p211) target = $region43
              $region40: #{conv3x3norm_forward.2} parent=35 // loop_body
                %v217 = vld [vmem:[%s215] sm:%s208]
                %218 = vst [vmem:[%s216] sm:%s208] %v217
                %v219 = vld [vmem:[%s215 + $0x8] sm:%s208]
                %220 = vst [vmem:[%s216 + $0x4] sm:%s208] %v219
                %v221 = vld [vmem:[%s215 + $0x10] sm:%s208]
                %222 = vst [vmem:[%s216 + $0x8] sm:%s208] %v221
                %v223 = vld [vmem:[%s215 + $0x18] sm:%s208]
                %224 = vst [vmem:[%s216 + $0xc] sm:%s208] %v223
                %v225 = vld [vmem:[%s215 + $0x20] sm:%s208]
                %226 = vst [vmem:[%s216 + $0x10] sm:%s208] %v225
                %v227 = vld [vmem:[%s215 + $0x28] sm:%s208]
                %228 = vst [vmem:[%s216 + $0x14] sm:%s208] %v227
                %v229 = vld [vmem:[%s215 + $0x30] sm:%s208]
                %230 = vst [vmem:[%s216 + $0x18] sm:%s208] %v229
                %v231 = vld [vmem:[%s215 + $0x38] sm:%s208]
                %232 = vst [vmem:[%s216 + $0x1c] sm:%s208] %v231
                %v233 = vld [vmem:[%s215 + $0x40] sm:%s208]
                %234 = vst [vmem:[%s216 + $0x20] sm:%s208] %v233
                %v235 = vld [vmem:[%s215 + $0x48] sm:%s208]
                %236 = vst [vmem:[%s216 + $0x24] sm:%s208] %v235
                %v237 = vld [vmem:[%s215 + $0x50] sm:%s208]
                %238 = vst [vmem:[%s216 + $0x28] sm:%s208] %v237
                %v239 = vld [vmem:[%s215 + $0x58] sm:%s208]
                %240 = vst [vmem:[%s216 + $0x2c] sm:%s208] %v239
                %v241 = vld [vmem:[%s215 + $0x60] sm:%s208]
                %242 = vst [vmem:[%s216 + $0x30] sm:%s208] %v241
                %v243 = vld [vmem:[%s215 + $0x68] sm:%s208]
                %244 = vst [vmem:[%s216 + $0x34] sm:%s208] %v243
                %v245 = vld [vmem:[%s215 + $0x70] sm:%s208]
                %246 = vst [vmem:[%s216 + $0x38] sm:%s208] %v245
                %v247 = vld [vmem:[%s215 + $0x78] sm:%s208]
                %248 = vst [vmem:[%s216 + $0x3c] sm:%s208] %v247
                %v249 = vld [vmem:[%s215 + $0x80] sm:%s208]
                %250 = vst [vmem:[%s216 + $0x40] sm:%s208] %v249
                %v251 = vld [vmem:[%s215 + $0x88] sm:%s208]
                %252 = vst [vmem:[%s216 + $0x44] sm:%s208] %v251
              $region41: #{conv3x3norm_forward.2} parent=35 // loop_footer
                %s214 = sadd.s32 1, %s210
              $region42: #{conv3x3norm_forward.2} parent=35 // loop_footer_branch
                %209 = sbr.rel target = $region38
              $region43: #{conv3x3norm_forward.2} parent=35 // loop_exit
                _
            $region36: #{conv3x3norm_forward.2} parent=27 // pred_fallthru
              _
          $region28: #{conv3x3norm_forward.2} parent=23 // pred_fallthru
            _
          %309 = vnop
        $region24: #{conv3x3norm_forward.2} parent=19 // pred_fallthru
          _
      $region20: #{conv3x3norm_forward.2} parent=5 // pred_fallthru
        _
      %p310 = scmp.le.s32.totalorder 1, %s11
      %p311 = scmp.lt.s32.totalorder %s11, 5
      %p312 = pnand %p310, %p311
      %p313 = pneg %p312
      // Predicated region
      $region62: #{conv3x3norm_forward.2} parent=5 // pred_check
        _
      $region63: #{conv3x3norm_forward.2} parent=5 // pred_check_branch
        %315 = sbr.rel (%p312) target = $region65
      $region64: #{conv3x3norm_forward.2} parent=5 // pred_region
        %s316 = ssub.s32 %s11, 1
        %s317 = sand.u32 %s47, 1
        %s318 = sand.u32 %s47, 1
        %s319 = smul.addr %s318, 72
        %s320 = scalar_lea.vmem [#allocation2], %s319
        // Predicated region
        $region66: #{conv3x3norm_forward.2} parent=64 // pred_check
          %p321 = pneg %p60
        $region67: #{conv3x3norm_forward.2} parent=64 // pred_check_branch
          %323 = sbr.rel (%p321) target = $region69
        $region68: #{conv3x3norm_forward.2} parent=64 // pred_region
          _
        $region69: #{conv3x3norm_forward.2} parent=64 // pred_fallthru
          _
        %s324 = sand.u32 %s47, 1
        %s325 = sand.u32 %s47, 1
        %s326 = smul.addr %s325, 72
        %s327 = scalar_lea.vmem [#allocation2], %s326
        %p328 = pneg %p60
        %p329 = pneg %p57
        %p330 = pneg %p81
        %p331 = pneg %p78
        %p332 = pneg %p111
        %p333 = pneg %p108
        %s334 = sand.u32 %s98, 1
        %s335 = sand.u32 %s98, 1
        %s336 = smul.addr %s335, 16
        %s337 = scalar_lea.vmem [#allocation3], %s336
        %p338 = pneg %p139
        %p339 = pneg %p136
        %p340 = scmp.lt.s32.totalorder %s21, 1
        %s341 = scalar_select %p340, %s21, 1
        %p342 = scmp.lt.s32.totalorder %s22, 1
        %s343 = scalar_select %p342, %s22, 1
        %s344 = smul.addr %s343, 2
        %s345 = smul.addr %s341, 4
        %s346 = sadd.s32 %s344, %s345
        %s347 = smul.addr %s346, 8
        %s348 = scalar_lea.vmem %s3, %s347
        %p349 = pneg %p167
        %p350 = pneg %p164
        %p351 = scmp.lt.s32.totalorder %s21, 1
        %s352 = scalar_select %p351, %s21, 1
        %p353 = scmp.lt.s32.totalorder %s22, 1
        %s354 = scalar_select %p353, %s22, 1
        %s355 = smul.addr %s354, 2
        %s356 = smul.addr %s352, 4
        %s357 = sadd.s32 %s355, %s356
        %s358 = smul.addr %s357, 8
        %s359 = scalar_lea.vmem %s4, %s358
        %s360 = sadd.s32 %s22, %s23
        %s361 = sadd.s32 %s22, %s23
        %p362 = scmp.lt.s32.totalorder %s21, 1
        %s363 = scalar_select %p362, %s21, 1
        %p364 = scmp.lt.s32.totalorder %s22, 1
        %s365 = scalar_select %p364, %s22, 1
        %s366 = smul.addr %s365, 2
        %s367 = smul.addr %s363, 4
        %s368 = sadd.s32 %s366, %s367
        %s369 = smul.addr %s368, 8
        %s370 = scalar_lea.vmem %s3, %s369
        %p371 = scmp.lt.s32.totalorder %s21, 1
        %s372 = scalar_select %p371, %s21, 1
        %p373 = scmp.lt.s32.totalorder %s22, 1
        %s374 = scalar_select %p373, %s22, 1
        %s375 = smul.addr %s374, 2
        %s376 = smul.addr %s372, 4
        %s377 = sadd.s32 %s375, %s376
        %s378 = smul.addr %s377, 8
        %s379 = scalar_lea.vmem %s4, %s378
        %p381 = scmp.eq.s32.totalorder %s23, 0
        // Predicated region
        $region70: #{conv3x3norm_forward.2} parent=64 // pred_check
          %p382 = pneg %p381
        $region71: #{conv3x3norm_forward.2} parent=64 // pred_check_branch
          %384 = sbr.rel (%p382) target = $region73
        $region72: #{conv3x3norm_forward.2} parent=64 // pred_region
          %vm385 = vcmask 7168
          %386 = vst.msk [vmem:[%s370] sm:$0xff] %vm385, 0.0
          %387 = vst.msk [vmem:[%s370 + $0x8] sm:$0xff] %vm385, 0.0
          %388 = vst.msk [vmem:[%s379] sm:$0xff] %vm385, 0.0
          %389 = vst.msk [vmem:[%s379 + $0x8] sm:$0xff] %vm385, 0.0
        $region73: #{conv3x3norm_forward.2} parent=64 // pred_fallthru
          _
        %v390 = vld [vmem:[%s1] sm:$0xff]
        %v391 = vld [vmem:[%s1 + $0x8] sm:$0xff]
        %v392 = vld [vmem:[%s320] sm:$0xf]
        %v393 = vld [vmem:[%s320 + $0x4] sm:$0xf]
        %v394 = vld [vmem:[%s320 + $0x8] sm:$0xf]
        %v395 = vld [vmem:[%s320 + $0xc] sm:$0xf]
        %v396 = vld [vmem:[%s320 + $0x10] sm:$0xf]
        %v397 = vld [vmem:[%s320 + $0x14] sm:$0xf]
        %v398 = vld [vmem:[%s320 + $0x18] sm:$0xf]
        %v399 = vld [vmem:[%s320 + $0x1c] sm:$0xf]
        %v400 = vld [vmem:[%s320 + $0x20] sm:$0xf]
        %v401 = vld [vmem:[%s320 + $0x24] sm:$0xf]
        %v402 = vld [vmem:[%s320 + $0x28] sm:$0xf]
        %v403 = vld [vmem:[%s320 + $0x2c] sm:$0xf]
        %v404 = vld [vmem:[%s320 + $0x30] sm:$0xf]
        %v405 = vld [vmem:[%s320 + $0x34] sm:$0xf]
        %v406 = vld [vmem:[%s320 + $0x38] sm:$0xf]
        %v407 = vld [vmem:[%s320 + $0x3c] sm:$0xf]
        %v408 = vld [vmem:[%s320 + $0x40] sm:$0xf]
        %v409 = vld [vmem:[%s320 + $0x44] sm:$0xf]
        %v412 = vunpack.c.l.b16 %v390
        %v413 = vunpack.c.h.b16 %v390
        %v414 = vunpack.c.l.b16 %v391
        %v415 = vunpack.c.h.b16 %v391
        %v416 = vpack.c.b16 %v414, %v412
        %v417 = vpack.c.b16 %v415, %v413
        %v437 = vunpack.c.l.b16 %v392
        %v438 = vunpack.c.l.b16 %v393
        %v439 = vunpack.c.l.b16 %v394
        %v440 = vunpack.c.l.b16 %v395
        %v441 = vunpack.c.l.b16 %v396
        %v442 = vunpack.c.l.b16 %v397
        %v443 = vunpack.c.l.b16 %v398
        %v444 = vunpack.c.l.b16 %v399
        %v445 = vunpack.c.l.b16 %v400
        %v446 = vunpack.c.l.b16 %v401
        %v447 = vunpack.c.l.b16 %v402
        %v448 = vunpack.c.l.b16 %v403
        %v449 = vunpack.c.l.b16 %v404
        %v450 = vunpack.c.l.b16 %v405
        %v451 = vunpack.c.l.b16 %v406
        %v452 = vunpack.c.l.b16 %v407
        %v453 = vunpack.c.l.b16 %v408
        %v454 = vunpack.c.l.b16 %v409
        %v455 = vpack.c.b16 %v438, %v437
        %v456 = vpack.c.b16 %v440, %v439
        %v457 = vpack.c.b16 %v442, %v441
        %v458 = vpack.c.b16 %v444, %v443
        %v459 = vpack.c.b16 %v446, %v445
        %v460 = vpack.c.b16 %v448, %v447
        %v461 = vpack.c.b16 %v450, %v449
        %v462 = vpack.c.b16 %v452, %v451
        %v463 = vpack.c.b16 %v454, %v453
        %vm473 = vcmask 130048
        %v475 = vsel %vm473, %v417, 0
        %477 = vmatpush.bf16.msra.mxu0 %v462
        %478 = vmatpush.bf16.msra.mxu0 %v461
        %479 = vmatpush.bf16.msra.mxu0 %v460
        %480 = vmatpush.bf16.msra.mxu0 %v459
        %481 = vmatpush.bf16.msra.mxu0 %v458
        %482 = vmatpush.bf16.msra.mxu0 %v457
        %483 = vmatpush.bf16.msra.mxu0 %v456
        %484 = vmatpush.bf16.msra.mxu0 %v455
        %485 = vmatmul.bf16.gmra.mxu0 %v416
        %v486 = vpop.f32.mrf.mxu0
        %v487 = vadd.f32 0.0, %v486
        %v488 = vpop.f32.mrf.mxu0
        %v489 = vadd.f32 0.0, %v488
        %490 = vdwg.mxu0
        %491 = vmatpush.bf16.msra.mxu0 0
        %492 = vmatpush.bf16.msra.mxu0 0
        %493 = vmatpush.bf16.msra.mxu0 0
        %494 = vmatpush.bf16.msra.mxu0 0
        %495 = vmatpush.bf16.msra.mxu0 0
        %496 = vmatpush.bf16.msra.mxu0 0
        %497 = vmatpush.bf16.msra.mxu0 0
        %498 = vmatpush.bf16.msra.mxu0 %v463
        %499 = vmatmul.bf16.gmra.mxu0 %v475
        %v500 = vpop.f32.mrf.mxu0
        %v501 = vadd.f32 %v487, %v500
        %v502 = vpop.f32.mrf.mxu0
        %v503 = vadd.f32 %v489, %v502
        %504 = vdwg.mxu0
        %505 = vst [vmem:[%s337] sm:$0xff] %v501
        %506 = vst [vmem:[%s337 + $0x8] sm:$0xff] %v503
        %v507 = vld [vmem:[%s370] sm:$0xff]
        %v508 = vld [vmem:[%s370 + $0x8] sm:$0xff]
        %509 = vadd.xlane.f32.xlu0 %v501
        %v510 = vpop.xlane.xlu0 %509
        %511 = vadd.xlane.f32.xlu0 %v503
        %v512 = vpop.xlane.xlu0 %511
        %v513 = vadd.f32 %v507, %v510
        %v514 = vadd.f32 %v508, %v512
        %vm515 = vcmask 7168
        %516 = vst.msk [vmem:[%s370] sm:$0xff] %vm515, %v513
        %517 = vst.msk [vmem:[%s370 + $0x8] sm:$0xff] %vm515, %v514
        %v518 = vld [vmem:[%s379] sm:$0xff]
        %v519 = vld [vmem:[%s379 + $0x8] sm:$0xff]
        %v520 = vmul.f32 %v501, %v501
        %v521 = vmul.f32 %v503, %v503
        %522 = vadd.xlane.f32.xlu0 %v520
        %v523 = vpop.xlane.xlu0 %522
        %524 = vadd.xlane.f32.xlu0 %v521
        %v525 = vpop.xlane.xlu0 %524
        %v526 = vadd.f32 %v518, %v523
        %v527 = vadd.f32 %v519, %v525
        %528 = vst.msk [vmem:[%s379] sm:$0xff] %vm515, %v526
        %529 = vst.msk [vmem:[%s379 + $0x8] sm:$0xff] %vm515, %v527
        %s530 = sand.u32 %s98, 1
        %s531 = sand.u32 %s98, 1
        %s532 = smul.addr %s531, 16
        %s533 = scalar_lea.vmem [#allocation3], %s532
        %p534 = scmp.lt.s32.totalorder %s21, 1
        %s535 = scalar_select %p534, %s21, 1
        %p536 = scmp.lt.s32.totalorder %s22, 1
        %s537 = scalar_select %p536, %s22, 1
        %s538 = smul.addr %s537, 2
        %s539 = smul.addr %s535, 4
        %s540 = sadd.s32 %s538, %s539
        %s541 = smul.addr %s540, 8
        %s542 = scalar_lea.vmem %s3, %s541
        %p543 = scmp.lt.s32.totalorder %s21, 1
        %s544 = scalar_select %p543, %s21, 1
        %p545 = scmp.lt.s32.totalorder %s22, 1
        %s546 = scalar_select %p545, %s22, 1
        %s547 = smul.addr %s546, 2
        %s548 = smul.addr %s544, 4
        %s549 = sadd.s32 %s547, %s548
        %s550 = smul.addr %s549, 8
        %s551 = scalar_lea.vmem %s4, %s550
        // Predicated region
        $region74: #{conv3x3norm_forward.2} parent=64 // pred_check
          %p552 = pneg %p108
        $region75: #{conv3x3norm_forward.2} parent=64 // pred_check_branch
          %554 = sbr.rel (%p552) target = $region77
        $region76: #{conv3x3norm_forward.2} parent=64 // pred_region
          %s555 = sadd.s32 %s22, %s23
          %s556 = smul.addr %s21, 4
          %s557 = sadd.s32 %s555, %s556
          %s558 = smul.addr %s557, 8
          %s559 = scalar_lea.vmem %s2, %s558
          // Predicated region
          $region78: #{conv3x3norm_forward.2} parent=76 // pred_check
            _
          $region79: #{conv3x3norm_forward.2} parent=76 // pred_check_branch
            %561 = sbr.rel (0) target = $region81
          $region80: #{conv3x3norm_forward.2} parent=76 // pred_region
            // Predicated region
            $region82: #{conv3x3norm_forward.2} parent=80 // pred_check
              _
            $region83: #{conv3x3norm_forward.2} parent=80 // pred_check_branch
              %563 = sbr.rel (0) target = $region85
            $region84: #{conv3x3norm_forward.2} parent=80 // pred_region
              // Predicated region
              $region97: #{conv3x3norm_forward.2} parent=84 // pred_check
                _
              $region98: #{conv3x3norm_forward.2} parent=84 // pred_check_branch
                %581 = sbr.rel (0) target = $region100
              $region99: #{conv3x3norm_forward.2} parent=84 // pred_region
                loop: start=0, step=1, limit=1
                $region101: #{conv3x3norm_forward.2} parent=99 // loop_pre_header
                  _
                $region102: #{conv3x3norm_forward.2} parent=99 // loop_header
                  %s583 = sphi 0, %s587
                  %p584 = scmp.ge.s32.totalorder %s583, 1
                  %s588 = sphi %s533, %s533
                  %s589 = sphi %s559, %s559
                $region103: #{conv3x3norm_forward.2} parent=99 // loop_header_branch
                  %586 = sbr.rel (%p584) target = $region107
                $region104: #{conv3x3norm_forward.2} parent=99 // loop_body
                  %v590 = vld [vmem:[%s588] sm:$0xff]
                  %591 = vst [vmem:[%s589] sm:$0xff] %v590
                  %v592 = vld [vmem:[%s588 + $0x8] sm:$0xff]
                  %593 = vst [vmem:[%s589 + $0x10] sm:$0xff] %v592
                $region105: #{conv3x3norm_forward.2} parent=99 // loop_footer
                  %s587 = sadd.s32 1, %s583
                $region106: #{conv3x3norm_forward.2} parent=99 // loop_footer_branch
                  %582 = sbr.rel target = $region102
                $region107: #{conv3x3norm_forward.2} parent=99 // loop_exit
                  _
              $region100: #{conv3x3norm_forward.2} parent=84 // pred_fallthru
                _
              // Predicated region
              $region108: #{conv3x3norm_forward.2} parent=84 // pred_check
                _
              $region109: #{conv3x3norm_forward.2} parent=84 // pred_check_branch
                %595 = sbr.rel target = $region111
              $region110: #{conv3x3norm_forward.2} parent=84 // pred_region
                _
              $region111: #{conv3x3norm_forward.2} parent=84 // pred_fallthru
                _
            $region85: #{conv3x3norm_forward.2} parent=80 // pred_fallthru
              _
            // Predicated region
            $region86: #{conv3x3norm_forward.2} parent=80 // pred_check
              _
            $region87: #{conv3x3norm_forward.2} parent=80 // pred_check_branch
              %565 = sbr.rel target = $region89
            $region88: #{conv3x3norm_forward.2} parent=80 // pred_region
              %s567 = ssub.s32 256, 1
              loop: start=0, step=1, limit=1
              $region90: #{conv3x3norm_forward.2} parent=88 // loop_pre_header
                _
              $region91: #{conv3x3norm_forward.2} parent=88 // loop_header
                %s569 = sphi 0, %s573
                %p570 = scmp.ge.s32.totalorder %s569, 1
                %s574 = sphi %s533, %s533
                %s575 = sphi %s559, %s559
              $region92: #{conv3x3norm_forward.2} parent=88 // loop_header_branch
                %572 = sbr.rel (%p570) target = $region96
              $region93: #{conv3x3norm_forward.2} parent=88 // loop_body
                %v576 = vld [vmem:[%s574] sm:%s567]
                %577 = vst [vmem:[%s575] sm:%s567] %v576
                %v578 = vld [vmem:[%s574 + $0x8] sm:%s567]
                %579 = vst [vmem:[%s575 + $0x10] sm:%s567] %v578
              $region94: #{conv3x3norm_forward.2} parent=88 // loop_footer
                %s573 = sadd.s32 1, %s569
              $region95: #{conv3x3norm_forward.2} parent=88 // loop_footer_branch
                %568 = sbr.rel target = $region91
              $region96: #{conv3x3norm_forward.2} parent=88 // loop_exit
                _
            $region89: #{conv3x3norm_forward.2} parent=80 // pred_fallthru
              _
          $region81: #{conv3x3norm_forward.2} parent=76 // pred_fallthru
            _
          %596 = vnop
        $region77: #{conv3x3norm_forward.2} parent=64 // pred_fallthru
          _
        // Predicated region
        $region112: #{conv3x3norm_forward.2} parent=64 // pred_check
          %p597 = pneg %p136
        $region113: #{conv3x3norm_forward.2} parent=64 // pred_check_branch
          %599 = sbr.rel (%p597) target = $region115
        $region114: #{conv3x3norm_forward.2} parent=64 // pred_region
          _
        $region115: #{conv3x3norm_forward.2} parent=64 // pred_fallthru
          _
        // Predicated region
        $region116: #{conv3x3norm_forward.2} parent=64 // pred_check
          %p600 = pneg %p164
        $region117: #{conv3x3norm_forward.2} parent=64 // pred_check_branch
          %602 = sbr.rel (%p600) target = $region119
        $region118: #{conv3x3norm_forward.2} parent=64 // pred_region
          _
        $region119: #{conv3x3norm_forward.2} parent=64 // pred_fallthru
          _
      $region65: #{conv3x3norm_forward.2} parent=5 // pred_fallthru
        _
      %p603 = scmp.le.s32.totalorder 2, %s11
      // Predicated region
      $region120: #{conv3x3norm_forward.2} parent=5 // pred_check
        %p604 = pneg %p603
      $region121: #{conv3x3norm_forward.2} parent=5 // pred_check_branch
        %606 = sbr.rel (%p604) target = $region123
      $region122: #{conv3x3norm_forward.2} parent=5 // pred_region
        %s607 = ssub.s32 %s11, 2
        // Predicated region
        $region124: #{conv3x3norm_forward.2} parent=122 // pred_check
          %p608 = pneg %p114
        $region125: #{conv3x3norm_forward.2} parent=122 // pred_check_branch
          %610 = sbr.rel (%p608) target = $region127
        $region126: #{conv3x3norm_forward.2} parent=122 // pred_region
          %s611 = sand.u32 %s99, 1
          %s612 = sand.u32 %s99, 1
          %s613 = smul.addr %s612, 16
          %s614 = scalar_lea.vmem [#allocation3], %s613
        $region127: #{conv3x3norm_forward.2} parent=122 // pred_fallthru
          _
        // Predicated region
        $region128: #{conv3x3norm_forward.2} parent=122 // pred_check
          %p615 = pneg %p142
        $region129: #{conv3x3norm_forward.2} parent=122 // pred_check_branch
          %617 = sbr.rel (%p615) target = $region131
        $region130: #{conv3x3norm_forward.2} parent=122 // pred_region
          %p618 = scmp.lt.s32.totalorder %s24, 1
          %s619 = scalar_select %p618, %s24, 1
          %p620 = scmp.lt.s32.totalorder %s25, 1
          %s621 = scalar_select %p620, %s25, 1
          %s622 = smul.addr %s621, 2
          %s623 = smul.addr %s619, 4
          %s624 = sadd.s32 %s622, %s623
          %s625 = smul.addr %s624, 8
          %s626 = scalar_lea.vmem %s3, %s625
        $region131: #{conv3x3norm_forward.2} parent=122 // pred_fallthru
          _
        // Predicated region
        $region132: #{conv3x3norm_forward.2} parent=122 // pred_check
          %p627 = pneg %p170
        $region133: #{conv3x3norm_forward.2} parent=122 // pred_check_branch
          %629 = sbr.rel (%p627) target = $region135
        $region134: #{conv3x3norm_forward.2} parent=122 // pred_region
          %p630 = scmp.lt.s32.totalorder %s24, 1
          %s631 = scalar_select %p630, %s24, 1
          %p632 = scmp.lt.s32.totalorder %s25, 1
          %s633 = scalar_select %p632, %s25, 1
          %s634 = smul.addr %s633, 2
          %s635 = smul.addr %s631, 4
          %s636 = sadd.s32 %s634, %s635
          %s637 = smul.addr %s636, 8
          %s638 = scalar_lea.vmem %s4, %s637
        $region135: #{conv3x3norm_forward.2} parent=122 // pred_fallthru
          _
      $region123: #{conv3x3norm_forward.2} parent=5 // pred_fallthru
        _
    $region6: #{conv3x3norm_forward.2} parent=1 // loop_footer
      %s15 = sadd.s32 1, %s11
    $region7: #{conv3x3norm_forward.2} parent=1 // loop_footer_branch
      %10 = sbr.rel target = $region3
    $region8: #{conv3x3norm_forward.2} parent=1 // loop_exit
      _

</llo_original>
